<compile_context>
chip_gen: v7x
topology: tpu7x:2x2x1
jax: 0.10.0
libtpu: 0.0.40
codegen_flags: <defaults>
</compile_context>

<pallas_src>
import functools

import numpy as np
import jax
import jax.numpy as jnp
from jax import lax
from jax.experimental import pallas as pl
from jax.experimental.pallas import tpu as pltpu


def _pick_tile(dim, candidates):
    """Largest MXU-friendly tile that divides `dim`, else the full dim."""
    for c in candidates:
        if dim >= c and dim % c == 0:
            return c
    return dim


# --------------------------------------------------------------------------
# Fused VICReg kernel.
# Grid = (num_pairs, n_chunks).  Scalar-prefetched ti/tj map pair -> (Di, Dj)
# with Dj >= Di (Gram symmetry; off-diagonal tiles counted twice).
# Per pair, accumulated across the N (contraction) axis:
#   * uncentered Gram blocks of both views (MXU, native dtype, f32 accumulate)
#   * f32 column sums of both tiles of both views (for the rank-1 mean
#     correction and the variance hinge)
#   * sum((Z_a - Z_b)^2) on diagonal pairs only (each D-tile covered once)
# At k == nk-1 only per-pair scalar partials are written out.
# --------------------------------------------------------------------------
def _vicreg_kernel(ti_ref, tj_ref,
                   zai_ref, zaj_ref, zbi_ref, zbj_ref,
                   out_ref,
                   gram_a, gram_b, sai, saj, sbi, sbj, inv_col,
                   *, inv_n, inv_nm1):
    p = pl.program_id(0)
    k = pl.program_id(1)
    nk = pl.num_programs(1)
    is_diag = ti_ref[p] == tj_ref[p]

    @pl.when(k == 0)
    def _init():
        gram_a[...] = jnp.zeros_like(gram_a)
        gram_b[...] = jnp.zeros_like(gram_b)
        sai[...] = jnp.zeros_like(sai)
        saj[...] = jnp.zeros_like(saj)
        sbi[...] = jnp.zeros_like(sbi)
        sbj[...] = jnp.zeros_like(sbj)
        inv_col[...] = jnp.zeros_like(inv_col)

    zai = zai_ref[...]
    zaj = zaj_ref[...]
    zbi = zbi_ref[...]
    zbj = zbj_ref[...]

    # Uncentered Gram on the native input dtype (bf16 feeds the MXU directly),
    # contracting over the row axis (no explicit transpose); f32 accumulation.
    dn = (((0,), (0,)), ((), ()))
    gram_a[...] += lax.dot_general(zai, zaj, dimension_numbers=dn,
                                   preferred_element_type=jnp.float32)
    gram_b[...] += lax.dot_general(zbi, zbj, dimension_numbers=dn,
                                   preferred_element_type=jnp.float32)

    # f32 column sums for the rank-1 mean correction / variance hinge.
    sai[...] += jnp.sum(zai.astype(jnp.float32), axis=0, keepdims=True)
    saj[...] += jnp.sum(zaj.astype(jnp.float32), axis=0, keepdims=True)
    sbi[...] += jnp.sum(zbi.astype(jnp.float32), axis=0, keepdims=True)
    sbj[...] += jnp.sum(zbj.astype(jnp.float32), axis=0, keepdims=True)

    # Invariance (MSE) partials: diagonal pairs cover each D-tile exactly once.
    @pl.when(is_diag)
    def _inv():
        diff = zai.astype(jnp.float32) - zbi.astype(jnp.float32)
        inv_col[...] += jnp.sum(diff * diff, axis=0, keepdims=True)

    @pl.when(k == nk - 1)
    def _finalize():
        # Rank-1 mean correction: sum_n (x_i - m_i)(x_j - m_j) = G_ij - s_i s_j / N
        corr_a = lax.dot_general(sai[...], saj[...], dimension_numbers=dn,
                                 preferred_element_type=jnp.float32) * inv_n
        corr_b = lax.dot_general(sbi[...], sbj[...], dimension_numbers=dn,
                                 preferred_element_type=jnp.float32) * inv_n
        ga = gram_a[...] - corr_a
        gb = gram_b[...] - corr_b

        factor = jnp.where(is_diag, 1.0, 2.0).astype(jnp.float32)     # symmetry x2
        diag_gate = jnp.where(is_diag, 1.0, 0.0).astype(jnp.float32)

        sq_a = jnp.sum(ga * ga) * factor
        sq_b = jnp.sum(gb * gb) * factor

        td = ga.shape[0]
        rows = lax.broadcasted_iota(jnp.int32, (td, td), 0)
        cols = lax.broadcasted_iota(jnp.int32, (td, td), 1)
        eye = (rows == cols).astype(jnp.float32)
        diag_a = jnp.sum(ga * eye, axis=0, keepdims=True)   # (1, td) centered sumsq
        diag_b = jnp.sum(gb * eye, axis=0, keepdims=True)

        diag_sq_a = jnp.sum(diag_a * diag_a) * diag_gate
        diag_sq_b = jnp.sum(diag_b * diag_b) * diag_gate

        # Variance hinge (only meaningful on diagonal pairs).  Clamp before sqrt
        # so off-diagonal pairs never produce NaN (NaN * 0 gate would stay NaN).
        var_a = jnp.maximum(diag_a, 0.0) * inv_nm1
        var_b = jnp.maximum(diag_b, 0.0) * inv_nm1
        std_a = jnp.sqrt(var_a + 1e-4)
        std_b = jnp.sqrt(var_b + 1e-4)
        hinge_a = jnp.sum(jnp.maximum(1.0 - std_a, 0.0)) * diag_gate
        hinge_b = jnp.sum(jnp.maximum(1.0 - std_b, 0.0)) * diag_gate

        inv_partial = jnp.sum(inv_col[...])   # stays zero for off-diagonal pairs

        lane = lax.broadcasted_iota(jnp.int32, (1, 1, 8), 2)
        vals = (jnp.where(lane == 0, sq_a, 0.0)
                + jnp.where(lane == 1, sq_b, 0.0)
                + jnp.where(lane == 2, diag_sq_a, 0.0)
                + jnp.where(lane == 3, diag_sq_b, 0.0)
                + jnp.where(lane == 4, hinge_a, 0.0)
                + jnp.where(lane == 5, hinge_b, 0.0)
                + jnp.where(lane == 6, inv_partial, 0.0))
        out_ref[...] = vals.astype(jnp.float32)


def vicreg_loss(z_a, z_b, inv_weight=1.0, var_weight=1.0, cov_weight=0.04):
    """Returns (loss, acc) matching VICReg.forward((Z_a, Z_b))."""
    assert z_a.shape == z_b.shape and z_a.ndim == 2
    n, d = z_a.shape
    tn = _pick_tile(n, (512, 256, 128))   # contraction chunk
    td = _pick_tile(d, (512, 256, 128))   # Gram output tile
    n_tiles = n // tn
    d_tiles = d // td

    pairs = [(i, j) for i in range(d_tiles) for j in range(i, d_tiles)]
    num_pairs = len(pairs)
    ti = jnp.asarray([p[0] for p in pairs], dtype=jnp.int32)
    tj = jnp.asarray([p[1] for p in pairs], dtype=jnp.int32)

    inv_n = 1.0 / float(n)
    inv_nm1 = 1.0 / float(n - 1)
    kernel = functools.partial(_vicreg_kernel, inv_n=inv_n, inv_nm1=inv_nm1)

    col_spec_i = pl.BlockSpec((tn, td), lambda p_, k_, ti_, tj_: (k_, ti_[p_]))
    col_spec_j = pl.BlockSpec((tn, td), lambda p_, k_, ti_, tj_: (k_, tj_[p_]))

    partials = pl.pallas_call(
        kernel,
        out_shape=jax.ShapeDtypeStruct((num_pairs, 1, 8), jnp.float32),
        grid_spec=pltpu.PrefetchScalarGridSpec(
            num_scalar_prefetch=2,
            grid=(num_pairs, n_tiles),
            in_specs=[col_spec_i, col_spec_j,    # Z_a (Di, Dj) column tiles
                      col_spec_i, col_spec_j],   # Z_b (Di, Dj) column tiles
            out_specs=pl.BlockSpec((1, 1, 8),
                                   lambda p_, k_, ti_, tj_: (p_, 0, 0)),
            scratch_shapes=[pltpu.VMEM((td, td), jnp.float32),   # gram_a
                            pltpu.VMEM((td, td), jnp.float32),   # gram_b
                            pltpu.VMEM((1, td), jnp.float32),    # colsum a_i
                            pltpu.VMEM((1, td), jnp.float32),    # colsum a_j
                            pltpu.VMEM((1, td), jnp.float32),    # colsum b_i
                            pltpu.VMEM((1, td), jnp.float32),    # colsum b_j
                            pltpu.VMEM((1, td), jnp.float32)],   # inv partial
        ),
        compiler_params=pltpu.CompilerParams(
            dimension_semantics=("parallel", "arbitrary"),
            vmem_limit_bytes=48 * 1024 * 1024),
    )(ti, tj, z_a, z_a, z_b, z_b)

    # ---------------- final O(1) scalar combine ----------------
    part = partials.reshape(num_pairs, 8)
    sq_a, sq_b = jnp.sum(part[:, 0]), jnp.sum(part[:, 1])
    diag_sq_a, diag_sq_b = jnp.sum(part[:, 2]), jnp.sum(part[:, 3])
    hinge_a, hinge_b = jnp.sum(part[:, 4]), jnp.sum(part[:, 5])
    inv_total = jnp.sum(part[:, 6])

    inv_loss = inv_total * (1.0 / float(n * d))
    var_loss = (hinge_a + hinge_b) * (1.0 / float(d))
    cov_scale = (inv_nm1 * inv_nm1) / float(d)
    cov_loss = (sq_a - diag_sq_a + sq_b - diag_sq_b) * cov_scale

    loss = (float(inv_weight) * inv_loss
            + float(var_weight) * var_loss
            + float(cov_weight) * cov_loss)
    acc = 0.0   # matches the PyTorch module (hard-coded constant)
    return loss, acc


# --------------------------------------------------------------------------
# Reference + demo
# --------------------------------------------------------------------------
def _ref_loss(za, zb, inv_w, var_w, cov_w):
    za = np.asarray(jnp.asarray(za, jnp.float32), dtype=np.float64)
    zb = np.asarray(jnp.asarray(zb, jnp.float32), dtype=np.float64)
    n, d = za.shape
    inv = np.mean((za - zb) ** 2)
    std_a = np.sqrt(za.var(axis=0, ddof=1) + 1e-4)
    std_b = np.sqrt(zb.var(axis=0, ddof=1) + 1e-4)
    var = np.mean(np.maximum(1.0 - std_a, 0.0)) + np.mean(np.maximum(1.0 - std_b, 0.0))
    zac = za - za.mean(axis=0)
    zbc = zb - zb.mean(axis=0)
    ca = zac.T @ zac / (n - 1)
    cb = zbc.T @ zbc / (n - 1)
    off = lambda c: (c ** 2).sum() - (np.diag(c) ** 2).sum()
    cov = off(ca) / d + off(cb) / d
    return inv_w * inv + var_w * var + cov_w * cov


if __name__ == "__main__":
    base_key = jax.random.PRNGKey(0)

    def run_case(n, d, dtype=jnp.float32, rtol=1e-3):
        k1, k2 = jax.random.split(jax.random.fold_in(base_key, n * 100003 + d))
        z_a = jax.random.normal(k1, (n, d), dtype=jnp.float32)
        z_b = z_a + 0.1 * jax.random.normal(k2, (n, d), dtype=jnp.float32)
        z_a = z_a.astype(dtype)
        z_b = z_b.astype(dtype)

        loss, acc = vicreg_loss(z_a, z_b)
        loss = jax.block_until_ready(loss)

        expected = _ref_loss(z_a, z_b, 1.0, 1.0, 0.04)
        got = float(loss)
        assert np.isfinite(got), got
        assert abs(got - expected) <= 1e-3 + rtol * abs(expected), (got, expected)
        assert acc == 0.0
        return got

    run_case(8, 32)                                    # single-tile path (full-array blocks)
    run_case(384, 1024)                                # 3 N-chunks x 2 D-tiles -> 3 pairs (off-diag exercised)
    run_case(384, 1024, dtype=jnp.bfloat16, rtol=5e-3) # bf16 native MXU feed path
    print("KERNEL_OK")
</pallas_src>

<mosaic_0001>
module attributes {stable_mosaic.version = 11 : i64} {
  func.func @_vicreg_kernel(%arg0: i32, %arg1: i32, %arg2: memref<1xi32, #tpu.memory_space<smem>>, %arg3: memref<1xi32, #tpu.memory_space<smem>>, %arg4: memref<8x32xf32, #tpu.memory_space<vmem>>, %arg5: memref<8x32xf32, #tpu.memory_space<vmem>>, %arg6: memref<8x32xf32, #tpu.memory_space<vmem>>, %arg7: memref<8x32xf32, #tpu.memory_space<vmem>>, %arg8: memref<1x1x8xf32, #tpu.memory_space<vmem>>, %arg9: memref<32x32xf32, #tpu.memory_space<vmem>>, %arg10: memref<32x32xf32, #tpu.memory_space<vmem>>, %arg11: memref<1x32xf32, #tpu.memory_space<vmem>>, %arg12: memref<1x32xf32, #tpu.memory_space<vmem>>, %arg13: memref<1x32xf32, #tpu.memory_space<vmem>>, %arg14: memref<1x32xf32, #tpu.memory_space<vmem>>, %arg15: memref<1x32xf32, #tpu.memory_space<vmem>>) attributes {dimension_semantics = [#tpu.dimension_semantics<parallel>, #tpu.dimension_semantics<arbitrary>], iteration_bounds = array<i64: 1, 1>, scalar_prefetch = 2 : i64, scratch_operands = 7 : i64, tpu.core_type = #tpu.core_type<tc>, window_params = [{transform_indices = @transform_0, window_bounds = array<i64: 8, 32>}, {transform_indices = @transform_1, window_bounds = array<i64: 8, 32>}, {transform_indices = @transform_2, window_bounds = array<i64: 8, 32>}, {transform_indices = @transform_3, window_bounds = array<i64: 8, 32>}, {transform_indices = @transform_4, window_bounds = array<i64: 1, 1, 8>}]} {
    %0 = arith.index_cast %arg0 : i32 to index
    %1 = memref.load %arg2[%0] : memref<1xi32, #tpu.memory_space<smem>>
    %2 = arith.index_cast %arg0 : i32 to index
    %3 = memref.load %arg3[%2] : memref<1xi32, #tpu.memory_space<smem>>
    %4 = arith.cmpi eq, %1, %3 : i32
    %c0_i32 = arith.constant 0 : i32
    %5 = arith.cmpi eq, %arg1, %c0_i32 : i32
    %6 = arith.extui %5 : i1 to i32
    %c0_i32_0 = arith.constant 0 : i32
    %7 = arith.cmpi ne, %6, %c0_i32_0 : i32
    scf.if %7 {
      %cst_40 = arith.constant 0.000000e+00 : f32
      %45 = vector.broadcast %cst_40 : f32 to vector<32x32xf32>
      %c0_41 = arith.constant 0 : index
      %c0_42 = arith.constant 0 : index
      %46 = vector.load %arg9[%c0_41, %c0_42] : memref<32x32xf32, #tpu.memory_space<vmem>>, vector<32x32xf32>
      tpu.vector_store %arg9[%c0_41, %c0_42], %45 {strides = array<i32>} : memref<32x32xf32, #tpu.memory_space<vmem>>, vector<32x32xf32>,
      %cst_43 = arith.constant 0.000000e+00 : f32
      %47 = vector.broadcast %cst_43 : f32 to vector<32x32xf32>
      %c0_44 = arith.constant 0 : index
      %c0_45 = arith.constant 0 : index
      %48 = vector.load %arg10[%c0_44, %c0_45] : memref<32x32xf32, #tpu.memory_space<vmem>>, vector<32x32xf32>
      tpu.vector_store %arg10[%c0_44, %c0_45], %47 {strides = array<i32>} : memref<32x32xf32, #tpu.memory_space<vmem>>, vector<32x32xf32>,
      %cst_46 = arith.constant 0.000000e+00 : f32
      %49 = vector.broadcast %cst_46 : f32 to vector<1x32xf32>
      %c0_47 = arith.constant 0 : index
      %c0_48 = arith.constant 0 : index
      %50 = vector.load %arg11[%c0_47, %c0_48] : memref<1x32xf32, #tpu.memory_space<vmem>>, vector<1x32xf32>
      tpu.vector_store %arg11[%c0_47, %c0_48], %49 {strides = array<i32>} : memref<1x32xf32, #tpu.memory_space<vmem>>, vector<1x32xf32>,
      %cst_49 = arith.constant 0.000000e+00 : f32
      %51 = vector.broadcast %cst_49 : f32 to vector<1x32xf32>
      %c0_50 = arith.constant 0 : index
      %c0_51 = arith.constant 0 : index
      %52 = vector.load %arg12[%c0_50, %c0_51] : memref<1x32xf32, #tpu.memory_space<vmem>>, vector<1x32xf32>
      tpu.vector_store %arg12[%c0_50, %c0_51], %51 {strides = array<i32>} : memref<1x32xf32, #tpu.memory_space<vmem>>, vector<1x32xf32>,
      %cst_52 = arith.constant 0.000000e+00 : f32
      %53 = vector.broadcast %cst_52 : f32 to vector<1x32xf32>
      %c0_53 = arith.constant 0 : index
      %c0_54 = arith.constant 0 : index
      %54 = vector.load %arg13[%c0_53, %c0_54] : memref<1x32xf32, #tpu.memory_space<vmem>>, vector<1x32xf32>
      tpu.vector_store %arg13[%c0_53, %c0_54], %53 {strides = array<i32>} : memref<1x32xf32, #tpu.memory_space<vmem>>, vector<1x32xf32>,
      %cst_55 = arith.constant 0.000000e+00 : f32
      %55 = vector.broadcast %cst_55 : f32 to vector<1x32xf32>
      %c0_56 = arith.constant 0 : index
      %c0_57 = arith.constant 0 : index
      %56 = vector.load %arg14[%c0_56, %c0_57] : memref<1x32xf32, #tpu.memory_space<vmem>>, vector<1x32xf32>
      tpu.vector_store %arg14[%c0_56, %c0_57], %55 {strides = array<i32>} : memref<1x32xf32, #tpu.memory_space<vmem>>, vector<1x32xf32>,
      %cst_58 = arith.constant 0.000000e+00 : f32
      %57 = vector.broadcast %cst_58 : f32 to vector<1x32xf32>
      %c0_59 = arith.constant 0 : index
      %c0_60 = arith.constant 0 : index
      %58 = vector.load %arg15[%c0_59, %c0_60] : memref<1x32xf32, #tpu.memory_space<vmem>>, vector<1x32xf32>
      tpu.vector_store %arg15[%c0_59, %c0_60], %57 {strides = array<i32>} : memref<1x32xf32, #tpu.memory_space<vmem>>, vector<1x32xf32>,
    } else {
    }
    %c0 = arith.constant 0 : index
    %c0_1 = arith.constant 0 : index
    %8 = vector.load %arg4[%c0, %c0_1] : memref<8x32xf32, #tpu.memory_space<vmem>>, vector<8x32xf32>
    %c0_2 = arith.constant 0 : index
    %c0_3 = arith.constant 0 : index
    %9 = vector.load %arg5[%c0_2, %c0_3] : memref<8x32xf32, #tpu.memory_space<vmem>>, vector<8x32xf32>
    %c0_4 = arith.constant 0 : index
    %c0_5 = arith.constant 0 : index
    %10 = vector.load %arg6[%c0_4, %c0_5] : memref<8x32xf32, #tpu.memory_space<vmem>>, vector<8x32xf32>
    %c0_6 = arith.constant 0 : index
    %c0_7 = arith.constant 0 : index
    %11 = vector.load %arg7[%c0_6, %c0_7] : memref<8x32xf32, #tpu.memory_space<vmem>>, vector<8x32xf32>
    %c0_8 = arith.constant 0 : index
    %c0_9 = arith.constant 0 : index
    %12 = vector.load %arg9[%c0_8, %c0_9] : memref<32x32xf32, #tpu.memory_space<vmem>>, vector<32x32xf32>
    %cst = arith.constant dense<0.000000e+00> : vector<32x32xf32>
    %13 = tpu.matmul %8, %9, %cst {dimension_numbers = #tpu.dot_dimension_numbers<[0], [0], [1], [1], [0, 1, 1, 1], [], []>} : vector<8x32xf32>, vector<8x32xf32>, vector<32x32xf32> -> vector<32x32xf32>
    %14 = arith.addf %12, %13 : vector<32x32xf32>
    %c0_10 = arith.constant 0 : index
    %c0_11 = arith.constant 0 : index
    %15 = vector.load %arg9[%c0_10, %c0_11] : memref<32x32xf32, #tpu.memory_space<vmem>>, vector<32x32xf32>
    tpu.vector_store %arg9[%c0_10, %c0_11], %14 {strides = array<i32>} : memref<32x32xf32, #tpu.memory_space<vmem>>, vector<32x32xf32>,
    %c0_12 = arith.constant 0 : index
    %c0_13 = arith.constant 0 : index
    %16 = vector.load %arg10[%c0_12, %c0_13] : memref<32x32xf32, #tpu.memory_space<vmem>>, vector<32x32xf32>
    %cst_14 = arith.constant dense<0.000000e+00> : vector<32x32xf32>
    %17 = tpu.matmul %10, %11, %cst_14 {dimension_numbers = #tpu.dot_dimension_numbers<[0], [0], [1], [1], [0, 1, 1, 1], [], []>} : vector<8x32xf32>, vector<8x32xf32>, vector<32x32xf32> -> vector<32x32xf32>
    %18 = arith.addf %16, %17 : vector<32x32xf32>
    %c0_15 = arith.constant 0 : index
    %c0_16 = arith.constant 0 : index
    %19 = vector.load %arg10[%c0_15, %c0_16] : memref<32x32xf32, #tpu.memory_space<vmem>>, vector<32x32xf32>
    tpu.vector_store %arg10[%c0_15, %c0_16], %18 {strides = array<i32>} : memref<32x32xf32, #tpu.memory_space<vmem>>, vector<32x32xf32>,
    %c0_17 = arith.constant 0 : index
    %c0_18 = arith.constant 0 : index
    %20 = vector.load %arg11[%c0_17, %c0_18] : memref<1x32xf32, #tpu.memory_space<vmem>>, vector<1x32xf32>
    %cst_19 = arith.constant dense<0.000000e+00> : vector<32xf32>
    %21 = vector.multi_reduction <add>, %8, %cst_19 [0] : vector<8x32xf32> to vector<32xf32>
    %22 = vector.shape_cast %21 : vector<32xf32> to vector<1x32xf32>
    %23 = arith.addf %20, %22 : vector<1x32xf32>
    %c0_20 = arith.constant 0 : index
    %c0_21 = arith.constant 0 : index
    %24 = vector.load %arg11[%c0_20, %c0_21] : memref<1x32xf32, #tpu.memory_space<vmem>>, vector<1x32xf32>
    tpu.vector_store %arg11[%c0_20, %c0_21], %23 {strides = array<i32>} : memref<1x32xf32, #tpu.memory_space<vmem>>, vector<1x32xf32>,
    %c0_22 = arith.constant 0 : index
    %c0_23 = arith.constant 0 : index
    %25 = vector.load %arg12[%c0_22, %c0_23] : memref<1x32xf32, #tpu.memory_space<vmem>>, vector<1x32xf32>
    %cst_24 = arith.constant dense<0.000000e+00> : vector<32xf32>
    %26 = vector.multi_reduction <add>, %9, %cst_24 [0] : vector<8x32xf32> to vector<32xf32>
    %27 = vector.shape_cast %26 : vector<32xf32> to vector<1x32xf32>
    %28 = arith.addf %25, %27 : vector<1x32xf32>
    %c0_25 = arith.constant 0 : index
    %c0_26 = arith.constant 0 : index
    %29 = vector.load %arg12[%c0_25, %c0_26] : memref<1x32xf32, #tpu.memory_space<vmem>>, vector<1x32xf32>
    tpu.vector_store %arg12[%c0_25, %c0_26], %28 {strides = array<i32>} : memref<1x32xf32, #tpu.memory_space<vmem>>, vector<1x32xf32>,
    %c0_27 = arith.constant 0 : index
    %c0_28 = arith.constant 0 : index
    %30 = vector.load %arg13[%c0_27, %c0_28] : memref<1x32xf32, #tpu.memory_space<vmem>>, vector<1x32xf32>
    %cst_29 = arith.constant dense<0.000000e+00> : vector<32xf32>
    %31 = vector.multi_reduction <add>, %10, %cst_29 [0] : vector<8x32xf32> to vector<32xf32>
    %32 = vector.shape_cast %31 : vector<32xf32> to vector<1x32xf32>
    %33 = arith.addf %30, %32 : vector<1x32xf32>
    %c0_30 = arith.constant 0 : index
    %c0_31 = arith.constant 0 : index
    %34 = vector.load %arg13[%c0_30, %c0_31] : memref<1x32xf32, #tpu.memory_space<vmem>>, vector<1x32xf32>
    tpu.vector_store %arg13[%c0_30, %c0_31], %33 {strides = array<i32>} : memref<1x32xf32, #tpu.memory_space<vmem>>, vector<1x32xf32>,
    %c0_32 = arith.constant 0 : index
    %c0_33 = arith.constant 0 : index
    %35 = vector.load %arg14[%c0_32, %c0_33] : memref<1x32xf32, #tpu.memory_space<vmem>>, vector<1x32xf32>
    %cst_34 = arith.constant dense<0.000000e+00> : vector<32xf32>
    %36 = vector.multi_reduction <add>, %11, %cst_34 [0] : vector<8x32xf32> to vector<32xf32>
    %37 = vector.shape_cast %36 : vector<32xf32> to vector<1x32xf32>
    %38 = arith.addf %35, %37 : vector<1x32xf32>
    %c0_35 = arith.constant 0 : index
    %c0_36 = arith.constant 0 : index
    %39 = vector.load %arg14[%c0_35, %c0_36] : memref<1x32xf32, #tpu.memory_space<vmem>>, vector<1x32xf32>
    tpu.vector_store %arg14[%c0_35, %c0_36], %38 {strides = array<i32>} : memref<1x32xf32, #tpu.memory_space<vmem>>, vector<1x32xf32>,
    %40 = arith.extui %4 : i1 to i32
    %c0_i32_37 = arith.constant 0 : i32
    %41 = arith.cmpi ne, %40, %c0_i32_37 : i32
    scf.if %41 {
      %45 = arith.subf %8, %10 : vector<8x32xf32>
      %c0_40 = arith.constant 0 : index
      %c0_41 = arith.constant 0 : index
      %46 = vector.load %arg15[%c0_40, %c0_41] : memref<1x32xf32, #tpu.memory_space<vmem>>, vector<1x32xf32>
      %47 = arith.mulf %45, %45 : vector<8x32xf32>
      %cst_42 = arith.constant dense<0.000000e+00> : vector<32xf32>
      %48 = vector.multi_reduction <add>, %47, %cst_42 [0] : vector<8x32xf32> to vector<32xf32>
      %49 = vector.shape_cast %48 : vector<32xf32> to vector<1x32xf32>
      %50 = arith.addf %46, %49 : vector<1x32xf32>
      %c0_43 = arith.constant 0 : index
      %c0_44 = arith.constant 0 : index
      %51 = vector.load %arg15[%c0_43, %c0_44] : memref<1x32xf32, #tpu.memory_space<vmem>>, vector<1x32xf32>
      tpu.vector_store %arg15[%c0_43, %c0_44], %50 {strides = array<i32>} : memref<1x32xf32, #tpu.memory_space<vmem>>, vector<1x32xf32>,
    } else {
    }
    %c0_i32_38 = arith.constant 0 : i32
    %42 = arith.cmpi eq, %arg1, %c0_i32_38 : i32
    %43 = arith.extui %42 : i1 to i32
    %c0_i32_39 = arith.constant 0 : i32
    %44 = arith.cmpi ne, %43, %c0_i32_39 : i32
    scf.if %44 {
      %c0_40 = arith.constant 0 : index
      %c0_41 = arith.constant 0 : index
      %45 = vector.load %arg11[%c0_40, %c0_41] : memref<1x32xf32, #tpu.memory_space<vmem>>, vector<1x32xf32>
      %c0_42 = arith.constant 0 : index
      %c0_43 = arith.constant 0 : index
      %46 = vector.load %arg12[%c0_42, %c0_43] : memref<1x32xf32, #tpu.memory_space<vmem>>, vector<1x32xf32>
      %cst_44 = arith.constant dense<0.000000e+00> : vector<32x32xf32>
      %47 = tpu.matmul %45, %46, %cst_44 {dimension_numbers = #tpu.dot_dimension_numbers<[0], [0], [1], [1], [0, 1, 1, 1], [], []>} : vector<1x32xf32>, vector<1x32xf32>, vector<32x32xf32> -> vector<32x32xf32>
      %cst_45 = arith.constant 1.250000e-01 : f32
      %48 = vector.broadcast %cst_45 : f32 to vector<32x32xf32>
      %49 = arith.mulf %47, %48 : vector<32x32xf32>
      %c0_46 = arith.constant 0 : index
      %c0_47 = arith.constant 0 : index
      %50 = vector.load %arg13[%c0_46, %c0_47] : memref<1x32xf32, #tpu.memory_space<vmem>>, vector<1x32xf32>
      %c0_48 = arith.constant 0 : index
      %c0_49 = arith.constant 0 : index
      %51 = vector.load %arg14[%c0_48, %c0_49] : memref<1x32xf32, #tpu.memory_space<vmem>>, vector<1x32xf32>
      %cst_50 = arith.constant dense<0.000000e+00> : vector<32x32xf32>
      %52 = tpu.matmul %50, %51, %cst_50 {dimension_numbers = #tpu.dot_dimension_numbers<[0], [0], [1], [1], [0, 1, 1, 1], [], []>} : vector<1x32xf32>, vector<1x32xf32>, vector<32x32xf32> -> vector<32x32xf32>
      %cst_51 = arith.constant 1.250000e-01 : f32
      %53 = vector.broadcast %cst_51 : f32 to vector<32x32xf32>
      %54 = arith.mulf %52, %53 : vector<32x32xf32>
      %c0_52 = arith.constant 0 : index
      %c0_53 = arith.constant 0 : index
      %55 = vector.load %arg9[%c0_52, %c0_53] : memref<32x32xf32, #tpu.memory_space<vmem>>, vector<32x32xf32>
      %56 = arith.subf %55, %49 : vector<32x32xf32>
      %c0_54 = arith.constant 0 : index
      %c0_55 = arith.constant 0 : index
      %57 = vector.load %arg10[%c0_54, %c0_55] : memref<32x32xf32, #tpu.memory_space<vmem>>, vector<32x32xf32>
      %58 = arith.subf %57, %54 : vector<32x32xf32>
      %cst_56 = arith.constant 1.000000e+00 : f32
      %cst_57 = arith.constant 2.000000e+00 : f32
      %59 = arith.select %4, %cst_56, %cst_57 : f32
      %cst_58 = arith.constant 1.000000e+00 : f32
      %cst_59 = arith.constant 0.000000e+00 : f32
      %60 = arith.select %4, %cst_58, %cst_59 : f32
      %61 = arith.mulf %56, %56 : vector<32x32xf32>
      %62 = vector.shape_cast %61 : vector<32x32xf32> to vector<1x32x32xf32>
      %cst_60 = arith.constant dense<0.000000e+00> : vector<1xf32>
      %63 = vector.multi_reduction <add>, %62, %cst_60 [1, 2] : vector<1x32x32xf32> to vector<1xf32>
      %64 = vector.shape_cast %63 : vector<1xf32> to vector<1x1x1xf32>
      %65 = vector.extract %64[0, 0, 0] : f32 from vector<1x1x1xf32>
      %66 = arith.mulf %65, %59 : f32
      %67 = arith.mulf %58, %58 : vector<32x32xf32>
      %68 = vector.shape_cast %67 : vector<32x32xf32> to vector<1x32x32xf32>
      %cst_61 = arith.constant dense<0.000000e+00> : vector<1xf32>
      %69 = vector.multi_reduction <add>, %68, %cst_61 [1, 2] : vector<1x32x32xf32> to vector<1xf32>
      %70 = vector.shape_cast %69 : vector<1xf32> to vector<1x1x1xf32>
      %71 = vector.extract %70[0, 0, 0] : f32 from vector<1x1x1xf32>
      %72 = arith.mulf %71, %59 : f32
      %73 = tpu.iota {dimensions = array<i32: 0>} : vector<32x32xi32>
      %74 = tpu.iota {dimensions = array<i32: 1>} : vector<32x32xi32>
      %75 = arith.cmpi eq, %73, %74 : vector<32x32xi32>
      %76 = arith.extui %75 : vector<32x32xi1> to vector<32x32xi32>
      %77 = arith.sitofp %76 : vector<32x32xi32> to vector<32x32xf32>
      %78 = arith.mulf %56, %77 : vector<32x32xf32>
      %cst_62 = arith.constant dense<0.000000e+00> : vector<32xf32>
      %79 = vector.multi_reduction <add>, %78, %cst_62 [0] : vector<32x32xf32> to vector<32xf32>
      %80 = vector.shape_cast %79 : vector<32xf32> to vector<1x32xf32>
      %81 = arith.mulf %58, %77 : vector<32x32xf32>
      %cst_63 = arith.constant dense<0.000000e+00> : vector<32xf32>
      %82 = vector.multi_reduction <add>, %81, %cst_63 [0] : vector<32x32xf32> to vector<32xf32>
      %83 = vector.shape_cast %82 : vector<32xf32> to vector<1x32xf32>
      %84 = arith.mulf %80, %80 : vector<1x32xf32>
      %85 = vector.shape_cast %84 : vector<1x32xf32> to vector<1x1x32xf32>
      %cst_64 = arith.constant dense<0.000000e+00> : vector<1xf32>
      %86 = vector.multi_reduction <add>, %85, %cst_64 [1, 2] : vector<1x1x32xf32> to vector<1xf32>
      %87 = vector.shape_cast %86 : vector<1xf32> to vector<1x1x1xf32>
      %88 = vector.extract %87[0, 0, 0] : f32 from vector<1x1x1xf32>
      %89 = arith.mulf %88, %60 : f32
      %90 = arith.mulf %83, %83 : vector<1x32xf32>
      %91 = vector.shape_cast %90 : vector<1x32xf32> to vector<1x1x32xf32>
      %cst_65 = arith.constant dense<0.000000e+00> : vector<1xf32>
      %92 = vector.multi_reduction <add>, %91, %cst_65 [1, 2] : vector<1x1x32xf32> to vector<1xf32>
      %93 = vector.shape_cast %92 : vector<1xf32> to vector<1x1x1xf32>
      %94 = vector.extract %93[0, 0, 0] : f32 from vector<1x1x1xf32>
      %95 = arith.mulf %94, %60 : f32
      %cst_66 = arith.constant 0.000000e+00 : f32
      %96 = vector.broadcast %cst_66 : f32 to vector<1x32xf32>
      %97 = arith.maximumf %80, %96 : vector<1x32xf32>
      %cst_67 = arith.constant 0.142857149 : f32
      %98 = vector.broadcast %cst_67 : f32 to vector<1x32xf32>
      %99 = arith.mulf %97, %98 : vector<1x32xf32>
      %cst_68 = arith.constant 0.000000e+00 : f32
      %100 = vector.broadcast %cst_68 : f32 to vector<1x32xf32>
      %101 = arith.maximumf %83, %100 : vector<1x32xf32>
      %cst_69 = arith.constant 0.142857149 : f32
      %102 = vector.broadcast %cst_69 : f32 to vector<1x32xf32>
      %103 = arith.mulf %101, %102 : vector<1x32xf32>
      %cst_70 = arith.constant 9.99999974E-5 : f32
      %104 = vector.broadcast %cst_70 : f32 to vector<1x32xf32>
      %105 = arith.addf %99, %104 : vector<1x32xf32>
      %106 = math.sqrt %105 : vector<1x32xf32>
      %cst_71 = arith.constant 9.99999974E-5 : f32
      %107 = vector.broadcast %cst_71 : f32 to vector<1x32xf32>
      %108 = arith.addf %103, %107 : vector<1x32xf32>
      %109 = math.sqrt %108 : vector<1x32xf32>
      %cst_72 = arith.constant 1.000000e+00 : f32
      %110 = vector.broadcast %cst_72 : f32 to vector<1x32xf32>
      %111 = arith.subf %110, %106 : vector<1x32xf32>
      %cst_73 = arith.constant 0.000000e+00 : f32
      %112 = vector.broadcast %cst_73 : f32 to vector<1x32xf32>
      %113 = arith.maximumf %111, %112 : vector<1x32xf32>
      %114 = vector.shape_cast %113 : vector<1x32xf32> to vector<1x1x32xf32>
      %cst_74 = arith.constant dense<0.000000e+00> : vector<1xf32>
      %115 = vector.multi_reduction <add>, %114, %cst_74 [1, 2] : vector<1x1x32xf32> to vector<1xf32>
      %116 = vector.shape_cast %115 : vector<1xf32> to vector<1x1x1xf32>
      %117 = vector.extract %116[0, 0, 0] : f32 from vector<1x1x1xf32>
      %118 = arith.mulf %117, %60 : f32
      %cst_75 = arith.constant 1.000000e+00 : f32
      %119 = vector.broadcast %cst_75 : f32 to vector<1x32xf32>
      %120 = arith.subf %119, %109 : vector<1x32xf32>
      %cst_76 = arith.constant 0.000000e+00 : f32
      %121 = vector.broadcast %cst_76 : f32 to vector<1x32xf32>
      %122 = arith.maximumf %120, %121 : vector<1x32xf32>
      %123 = vector.shape_cast %122 : vector<1x32xf32> to vector<1x1x32xf32>
      %cst_77 = arith.constant dense<0.000000e+00> : vector<1xf32>
      %124 = vector.multi_reduction <add>, %123, %cst_77 [1, 2] : vector<1x1x32xf32> to vector<1xf32>
      %125 = vector.shape_cast %124 : vector<1xf32> to vector<1x1x1xf32>
      %126 = vector.extract %125[0, 0, 0] : f32 from vector<1x1x1xf32>
      %127 = arith.mulf %126, %60 : f32
      %c0_78 = arith.constant 0 : index
      %c0_79 = arith.constant 0 : index
      %128 = vector.load %arg15[%c0_78, %c0_79] : memref<1x32xf32, #tpu.memory_space<vmem>>, vector<1x32xf32>
      %129 = vector.shape_cast %128 : vector<1x32xf32> to vector<1x1x32xf32>
      %cst_80 = arith.constant dense<0.000000e+00> : vector<1xf32>
      %130 = vector.multi_reduction <add>, %129, %cst_80 [1, 2] : vector<1x1x32xf32> to vector<1xf32>
      %131 = vector.shape_cast %130 : vector<1xf32> to vector<1x1x1xf32>
      %132 = vector.extract %131[0, 0, 0] : f32 from vector<1x1x1xf32>
      %133 = tpu.iota {dimensions = array<i32: 2>} : vector<1x1x8xi32>
      %c0_i32_81 = arith.constant 0 : i32
      %134 = vector.broadcast %c0_i32_81 : i32 to vector<1x1x8xi32>
      %135 = arith.cmpi eq, %133, %134 : vector<1x1x8xi32>
      %cst_82 = arith.constant 0.000000e+00 : f32
      %136 = vector.broadcast %66 : f32 to vector<1x1x8xf32>
      %137 = vector.broadcast %cst_82 : f32 to vector<1x1x8xf32>
      %138 = arith.select %135, %136, %137 : vector<1x1x8xi1>, vector<1x1x8xf32>
      %c1_i32 = arith.constant 1 : i32
      %139 = vector.broadcast %c1_i32 : i32 to vector<1x1x8xi32>
      %140 = arith.cmpi eq, %133, %139 : vector<1x1x8xi32>
      %cst_83 = arith.constant 0.000000e+00 : f32
      %141 = vector.broadcast %72 : f32 to vector<1x1x8xf32>
      %142 = vector.broadcast %cst_83 : f32 to vector<1x1x8xf32>
      %143 = arith.select %140, %141, %142 : vector<1x1x8xi1>, vector<1x1x8xf32>
      %144 = arith.addf %138, %143 : vector<1x1x8xf32>
      %c2_i32 = arith.constant 2 : i32
      %145 = vector.broadcast %c2_i32 : i32 to vector<1x1x8xi32>
      %146 = arith.cmpi eq, %133, %145 : vector<1x1x8xi32>
      %cst_84 = arith.constant 0.000000e+00 : f32
      %147 = vector.broadcast %89 : f32 to vector<1x1x8xf32>
      %148 = vector.broadcast %cst_84 : f32 to vector<1x1x8xf32>
      %149 = arith.select %146, %147, %148 : vector<1x1x8xi1>, vector<1x1x8xf32>
      %150 = arith.addf %144, %149 : vector<1x1x8xf32>
      %c3_i32 = arith.constant 3 : i32
      %151 = vector.broadcast %c3_i32 : i32 to vector<1x1x8xi32>
      %152 = arith.cmpi eq, %133, %151 : vector<1x1x8xi32>
      %cst_85 = arith.constant 0.000000e+00 : f32
      %153 = vector.broadcast %95 : f32 to vector<1x1x8xf32>
      %154 = vector.broadcast %cst_85 : f32 to vector<1x1x8xf32>
      %155 = arith.select %152, %153, %154 : vector<1x1x8xi1>, vector<1x1x8xf32>
      %156 = arith.addf %150, %155 : vector<1x1x8xf32>
      %c4_i32 = arith.constant 4 : i32
      %157 = vector.broadcast %c4_i32 : i32 to vector<1x1x8xi32>
      %158 = arith.cmpi eq, %133, %157 : vector<1x1x8xi32>
      %cst_86 = arith.constant 0.000000e+00 : f32
      %159 = vector.broadcast %118 : f32 to vector<1x1x8xf32>
      %160 = vector.broadcast %cst_86 : f32 to vector<1x1x8xf32>
      %161 = arith.select %158, %159, %160 : vector<1x1x8xi1>, vector<1x1x8xf32>
      %162 = arith.addf %156, %161 : vector<1x1x8xf32>
      %c5_i32 = arith.constant 5 : i32
      %163 = vector.broadcast %c5_i32 : i32 to vector<1x1x8xi32>
      %164 = arith.cmpi eq, %133, %163 : vector<1x1x8xi32>
      %cst_87 = arith.constant 0.000000e+00 : f32
      %165 = vector.broadcast %127 : f32 to vector<1x1x8xf32>
      %166 = vector.broadcast %cst_87 : f32 to vector<1x1x8xf32>
      %167 = arith.select %164, %165, %166 : vector<1x1x8xi1>, vector<1x1x8xf32>
      %168 = arith.addf %162, %167 : vector<1x1x8xf32>
      %c6_i32 = arith.constant 6 : i32
      %169 = vector.broadcast %c6_i32 : i32 to vector<1x1x8xi32>
      %170 = arith.cmpi eq, %133, %169 : vector<1x1x8xi32>
      %cst_88 = arith.constant 0.000000e+00 : f32
      %171 = vector.broadcast %132 : f32 to vector<1x1x8xf32>
      %172 = vector.broadcast %cst_88 : f32 to vector<1x1x8xf32>
      %173 = arith.select %170, %171, %172 : vector<1x1x8xi1>, vector<1x1x8xf32>
      %174 = arith.addf %168, %173 : vector<1x1x8xf32>
      %c0_89 = arith.constant 0 : index
      %c0_90 = arith.constant 0 : index
      %c0_91 = arith.constant 0 : index
      %175 = vector.load %arg8[%c0_89, %c0_90, %c0_91] : memref<1x1x8xf32, #tpu.memory_space<vmem>>, vector<1x1x8xf32>
      tpu.vector_store %arg8[%c0_89, %c0_90, %c0_91], %174 {strides = array<i32>} : memref<1x1x8xf32, #tpu.memory_space<vmem>>, vector<1x1x8xf32>,
    } else {
    }
    return
  }
  func.func @transform_0(%arg0: i32, %arg1: i32, %arg2: memref<1xi32, #tpu.memory_space<smem>>, %arg3: memref<1xi32, #tpu.memory_space<smem>>) -> (i32, i32) {
    %0 = arith.index_cast %arg0 : i32 to index
    %1 = memref.load %arg2[%0] : memref<1xi32, #tpu.memory_space<smem>>
    %c0_i32 = arith.constant 0 : i32
    return %arg1, %1 : i32, i32
  }
  func.func @transform_1(%arg0: i32, %arg1: i32, %arg2: memref<1xi32, #tpu.memory_space<smem>>, %arg3: memref<1xi32, #tpu.memory_space<smem>>) -> (i32, i32) {
    %0 = arith.index_cast %arg0 : i32 to index
    %1 = memref.load %arg3[%0] : memref<1xi32, #tpu.memory_space<smem>>
    %c0_i32 = arith.constant 0 : i32
    return %arg1, %1 : i32, i32
  }
  func.func @transform_2(%arg0: i32, %arg1: i32, %arg2: memref<1xi32, #tpu.memory_space<smem>>, %arg3: memref<1xi32, #tpu.memory_space<smem>>) -> (i32, i32) {
    %0 = arith.index_cast %arg0 : i32 to index
    %1 = memref.load %arg2[%0] : memref<1xi32, #tpu.memory_space<smem>>
    %c0_i32 = arith.constant 0 : i32
    return %arg1, %1 : i32, i32
  }
  func.func @transform_3(%arg0: i32, %arg1: i32, %arg2: memref<1xi32, #tpu.memory_space<smem>>, %arg3: memref<1xi32, #tpu.memory_space<smem>>) -> (i32, i32) {
    %0 = arith.index_cast %arg0 : i32 to index
    %1 = memref.load %arg3[%0] : memref<1xi32, #tpu.memory_space<smem>>
    %c0_i32 = arith.constant 0 : i32
    return %arg1, %1 : i32, i32
  }
  func.func @transform_4(%arg0: i32, %arg1: i32, %arg2: memref<1xi32, #tpu.memory_space<smem>>, %arg3: memref<1xi32, #tpu.memory_space<smem>>) -> (i32, i32, i32) {
    %c0_i32 = arith.constant 0 : i32
    %c0_i32_0 = arith.constant 0 : i32
    %c0_i32_1 = arith.constant 0 : i32
    return %arg0, %c0_i32, %c0_i32_0 : i32, i32, i32
  }
}

</mosaic_0001>

<llo_original>
// kernel: tpu_custom_call.1
$region0: #{tpu_custom_call.1}
  #allocation0 [shape = 'u32[]', space=smem, size = 0x4, offset = 0x4, fixed_abs, tag = 'smem constant byte address 0x4 - core index']
  #allocation1 [shape = 'u32[144,128]{1,0:T(1,128)}', space=vmem, size = 0x12000, scoped, tag = 'internal scratch']
  #allocation2 [shape = 'f32[32,32]{1,0:T(8,128)}', space=vmem, size = 0x4000, scoped, tag = 'scratch operand']
  #allocation3 [shape = 'f32[32,32]{1,0:T(8,128)}', space=vmem, size = 0x4000, scoped, tag = 'scratch operand']
  #allocation4 [shape = 'f32[1,32]{1,0:T(1,128)}', space=vmem, size = 0x200, scoped, tag = 'scratch operand']
  #allocation5 [shape = 'f32[1,32]{1,0:T(1,128)}', space=vmem, size = 0x200, scoped, tag = 'scratch operand']
  #allocation6 [shape = 'f32[1,32]{1,0:T(1,128)}', space=vmem, size = 0x200, scoped, tag = 'scratch operand']
  #allocation7 [shape = 'f32[1,32]{1,0:T(1,128)}', space=vmem, size = 0x200, scoped, tag = 'scratch operand']
  #allocation8 [shape = 'f32[1,32]{1,0:T(1,128)}', space=vmem, size = 0x200, scoped, tag = 'scratch operand']
  #allocation9 [shape = 's32[1]{0}', space=sflag, size = 0x4, scoped, tag = 'scoped memory for tpu_custom_call.1']
  #allocation10 [shape = 's32[1]{0:T(128)S(6)}', space=smem, size = 0x200, scoped, tag = 'prefetched SMEM operand 0']
  #allocation11 [shape = 's32[1]{0:T(128)S(6)}', space=smem, size = 0x200, scoped, tag = 'prefetched SMEM operand 1']
  %s0 = inlined_call_operand.<no memory space> [shape: s32[1], index: 0, kind: input, shape index: {}]
  %s1 = inlined_call_operand.<no memory space> [shape: s32[1], index: 1, kind: input, shape index: {}]
  %s2 = inlined_call_operand.hbm [shape: f32[8,32], index: 2, kind: input, shape index: {}]
  %s3 = inlined_call_operand.vmem [shape: f32[8,32], index: 3, kind: input, shape index: {}]
  %s4 = inlined_call_operand.hbm [shape: f32[8,32], index: 4, kind: input, shape index: {}]
  %s5 = inlined_call_operand.vmem [shape: f32[8,32], index: 5, kind: input, shape index: {}]
  %s6 = inlined_call_operand.hbm [shape: f32[1,1,8], index: 6, kind: output, shape index: {}]
  %s7 = sld [smem:[#allocation0]]
  $region46: #{tpu_custom_call.1} parent=0
    _
  %s9 = ssub.s32 1, %s7
  %s10 = scalar_select 0, %s9, %s7
  %11 = sst [smem:[#allocation10]] %s0
  %12 = sst [smem:[#allocation11]] %s1
  $region1: #{tpu_custom_call.1} parent=0
    #allocation12 [shape = 'u8[4096]{0}', space=vmem, size = 0x1000, scoped, tag = 'input window, operand 2, single buffered']
    #allocation13 [shape = 's32[1]{0}', space=sflag, size = 0x4, scoped, tag = 'scoped memory for tpu_custom_call.1']
    #allocation14 [shape = 's32[1]{0}', space=sflag, size = 0x4, scoped, tag = 'scoped memory for tpu_custom_call.1']
    #allocation15 [shape = 'u8[4096]{0}', space=vmem, size = 0x1000, scoped, tag = 'input window, operand 4, single buffered']
    #allocation16 [shape = 's32[1]{0}', space=sflag, size = 0x4, scoped, tag = 'scoped memory for tpu_custom_call.1']
    #allocation17 [shape = 'u8[512]{0}', space=vmem, size = 0x400, scoped, tag = 'output window, operand 0, single buffered']
    %13 = vsyncpa [#allocation13], 0
    %14 = vsyncpa [#allocation16], 0
    %15 = vsyncpa [#allocation14], 0
    // Predicated region
    $region2: #{tpu_custom_call.1} parent=1 // pred_check
      _
    $region3: #{tpu_custom_call.1} parent=1 // pred_check_branch
      %17 = sbr.rel (0) target = $region5
    $region4: #{tpu_custom_call.1} parent=1 // pred_region
      %s18 = sld [smem:[#allocation10]]
      %s20 = ssub.s32 128, 128
      %21 = vsyncadd [#allocation13], %s20
      %s22 = smul.addr %s18, 128
      %s23 = scalar_lea.hbm %s2, %s22
      %s25 = sshll.u32 [#allocation12], 4
      %s26 = int_to_ptr.vmem [resolvable:$true] %s25
      %28 = dma.hbm_to_vmem [thread:$0]  %s23, 128, %s26, [#allocation13]
    $region5: #{tpu_custom_call.1} parent=1 // pred_fallthru
      _
    // Predicated region
    $region6: #{tpu_custom_call.1} parent=1 // pred_check
      _
    $region7: #{tpu_custom_call.1} parent=1 // pred_check_branch
      %30 = sbr.rel (0) target = $region9
    $region8: #{tpu_custom_call.1} parent=1 // pred_region
      %s31 = sld [smem:[#allocation11]]
      %p32 = scmp.lt.s32.totalorder %s31, 0
      %s33 = scalar_select %p32, %s31, 0
      %s34 = smul.addr %s33, 8
      %s35 = scalar_lea.vmem %s3, %s34
      %s36 = sld [smem:[#allocation11]]
    $region9: #{tpu_custom_call.1} parent=1 // pred_fallthru
      _
    // Predicated region
    $region10: #{tpu_custom_call.1} parent=1 // pred_check
      _
    $region11: #{tpu_custom_call.1} parent=1 // pred_check_branch
      %38 = sbr.rel (0) target = $region13
    $region12: #{tpu_custom_call.1} parent=1 // pred_region
      %s39 = sld [smem:[#allocation10]]
      %s41 = ssub.s32 128, 128
      %42 = vsyncadd [#allocation16], %s41
      %s43 = smul.addr %s39, 128
      %s44 = scalar_lea.hbm %s4, %s43
      %s46 = sshll.u32 [#allocation15], 4
      %s47 = int_to_ptr.vmem [resolvable:$true] %s46
      %49 = dma.hbm_to_vmem [thread:$0]  %s44, 128, %s47, [#allocation16]
    $region13: #{tpu_custom_call.1} parent=1 // pred_fallthru
      _
    // Predicated region
    $region14: #{tpu_custom_call.1} parent=1 // pred_check
      _
    $region15: #{tpu_custom_call.1} parent=1 // pred_check_branch
      %51 = sbr.rel (0) target = $region17
    $region16: #{tpu_custom_call.1} parent=1 // pred_region
      %s52 = sld [smem:[#allocation11]]
      %p53 = scmp.lt.s32.totalorder %s52, 0
      %s54 = scalar_select %p53, %s52, 0
      %s55 = smul.addr %s54, 8
      %s56 = scalar_lea.vmem %s5, %s55
      %s57 = sld [smem:[#allocation11]]
    $region17: #{tpu_custom_call.1} parent=1 // pred_fallthru
      _
    // Predicated region
    $region18: #{tpu_custom_call.1} parent=1 // pred_check
      _
    $region19: #{tpu_custom_call.1} parent=1 // pred_check_branch
      %59 = sbr.rel (0) target = $region21
    $region20: #{tpu_custom_call.1} parent=1 // pred_region
      %60 = dma.done [#allocation13], 128
    $region21: #{tpu_custom_call.1} parent=1 // pred_fallthru
      _
    // Predicated region
    $region22: #{tpu_custom_call.1} parent=1 // pred_check
      _
    $region23: #{tpu_custom_call.1} parent=1 // pred_check_branch
      %62 = sbr.rel (0) target = $region25
    $region24: #{tpu_custom_call.1} parent=1 // pred_region
      %63 = dma.done [#allocation16], 128
    $region25: #{tpu_custom_call.1} parent=1 // pred_fallthru
      _
    %s64 = sld [smem:[#allocation11]]
    %p65 = scmp.lt.s32.totalorder %s64, 0
    %s66 = scalar_select %p65, %s64, 0
    %s67 = smul.addr %s66, 8
    %s68 = scalar_lea.vmem %s3, %s67
    %s69 = sld [smem:[#allocation11]]
    %p70 = scmp.lt.s32.totalorder %s69, 0
    %s71 = scalar_select %p70, %s69, 0
    %s72 = smul.addr %s71, 8
    %s73 = scalar_lea.vmem %s5, %s72
    %s74 = sld [smem:[#allocation10]]
    %s75 = sld [smem:[#allocation11]]
    %p76 = scmp.lt.s32.totalorder %s75, 0
    %s77 = scalar_select %p76, %s75, 0
    %s78 = smul.addr %s77, 8
    %s79 = scalar_lea.vmem %s3, %s78
    %s80 = sld [smem:[#allocation11]]
    %s81 = sld [smem:[#allocation10]]
    %s82 = sld [smem:[#allocation11]]
    %p83 = scmp.lt.s32.totalorder %s82, 0
    %s84 = scalar_select %p83, %s82, 0
    %s85 = smul.addr %s84, 8
    %s86 = scalar_lea.vmem %s5, %s85
    %s87 = sld [smem:[#allocation11]]
    %s88 = sld [smem:[#allocation10]]
    %s89 = sld [smem:[#allocation11]]
    %p90 = scmp.eq.s32.totalorder %s88, %s89
    %p91 = scmp.eq.s32.totalorder 0, 0
    // Predicated region
    $region26: #{tpu_custom_call.1} parent=1 // pred_check
      %p92 = pneg %p91
    $region27: #{tpu_custom_call.1} parent=1 // pred_check_branch
      %94 = sbr.rel (%p92) target = $region29
    $region28: #{tpu_custom_call.1} parent=1 // pred_region
      %vm95 = vcmask 261120
      %96 = vst.msk [vmem:[#allocation2] sm:$0xff] %vm95, 0.0
      %97 = vst.msk [vmem:[#allocation2 + $0x8] sm:$0xff] %vm95, 0.0
      %98 = vst.msk [vmem:[#allocation2 + $0x10] sm:$0xff] %vm95, 0.0
      %99 = vst.msk [vmem:[#allocation2 + $0x18] sm:$0xff] %vm95, 0.0
      %100 = vst.msk [vmem:[#allocation3] sm:$0xff] %vm95, 0.0
      %101 = vst.msk [vmem:[#allocation3 + $0x8] sm:$0xff] %vm95, 0.0
      %102 = vst.msk [vmem:[#allocation3 + $0x10] sm:$0xff] %vm95, 0.0
      %103 = vst.msk [vmem:[#allocation3 + $0x18] sm:$0xff] %vm95, 0.0
      %vm104 = vcmask 253952
      %105 = vst.msk [vmem:[#allocation4] sm:$0x1] %vm104, 0.0
      %106 = vst.msk [vmem:[#allocation5] sm:$0x1] %vm104, 0.0
      %107 = vst.msk [vmem:[#allocation6] sm:$0x1] %vm104, 0.0
      %108 = vst.msk [vmem:[#allocation7] sm:$0x1] %vm104, 0.0
      %109 = vst.msk [vmem:[#allocation8] sm:$0x1] %vm104, 0.0
    $region29: #{tpu_custom_call.1} parent=1 // pred_fallthru
      _
    %v110 = vld [vmem:[#allocation12] sm:$0xff]
    %v111 = vld [vmem:[%s79] sm:$0xff]
    %v112 = vld [vmem:[#allocation15] sm:$0xff]
    %v113 = vld [vmem:[%s86] sm:$0xff]
    %v114 = vld [vmem:[#allocation2] sm:$0xff]
    %v115 = vld [vmem:[#allocation2 + $0x8] sm:$0xff]
    %v116 = vld [vmem:[#allocation2 + $0x10] sm:$0xff]
    %v117 = vld [vmem:[#allocation2 + $0x18] sm:$0xff]
    %118 = vxpose.xlu0.b32.start [1/16] %v110, 128
    %119 = vxpose.xlu0.b32.cont [2/16] 0.0, 128
    %120 = vxpose.xlu0.b32.cont [3/16] 0.0, 128
    %121 = vxpose.xlu0.b32.cont [4/16] 0.0, 128
    %122 = vxpose.xlu0.b32.cont [5/16] 0.0, 128
    %123 = vxpose.xlu0.b32.cont [6/16] 0.0, 128
    %124 = vxpose.xlu0.b32.cont [7/16] 0.0, 128
    %125 = vxpose.xlu0.b32.cont [8/16] 0.0, 128
    %126 = vxpose.xlu0.b32.cont [9/16] 0.0, 128
    %127 = vxpose.xlu0.b32.cont [10/16] 0.0, 128
    %128 = vxpose.xlu0.b32.cont [11/16] 0.0, 128
    %129 = vxpose.xlu0.b32.cont [12/16] 0.0, 128
    %130 = vxpose.xlu0.b32.cont [13/16] 0.0, 128
    %131 = vxpose.xlu0.b32.cont [14/16] 0.0, 128
    %132 = vxpose.xlu0.b32.cont [15/16] 0.0, 128
    %133 = vxpose.xlu0.b32.end [16/16] 0.0, 128
    %v134 = vpop.trf.xlu0
    %v135 = vpop.trf.xlu0
    %v136 = vpop.trf.xlu0
    %v137 = vpop.trf.xlu0
    %v138 = vpop.trf.xlu0
    %v139 = vpop.trf.xlu0
    %v140 = vpop.trf.xlu0
    %v141 = vpop.trf.xlu0
    %v142 = vpop.trf.xlu0
    %v143 = vpop.trf.xlu0
    %v144 = vpop.trf.xlu0
    %v145 = vpop.trf.xlu0
    %v146 = vpop.trf.xlu0
    %v147 = vpop.trf.xlu0
    %v148 = vpop.trf.xlu0
    %v149 = vpop.trf.xlu0
    %vm150 = vcmask 64512
    %v152 = vsel %vm150, %v134, 0
    %v155 = vsel %vm150, %v135, 0
    %v158 = vsel %vm150, %v136, 0
    %v161 = vsel %vm150, %v137, 0
    %163 = vmatprep.subr.mxu0 0.0
    %164 = vmatpush1.msra.mxu0 %v111
    %165 = vmatprep.subr.mxu0 0.0
    %166 = vmatpush1.msra.mxu0 0.0
    %167 = vmatprep.subr.mxu0 0.0
    %168 = vmatpush1.msra.mxu0 0.0
    %169 = vmatprep.subr.mxu0 0.0
    %170 = vmatpush1.msra.mxu0 0.0
    %171 = vmatprep.subr.mxu0 0.0
    %172 = vmatpush1.msra.mxu0 0.0
    %173 = vmatprep.subr.mxu0 0.0
    %174 = vmatpush1.msra.mxu0 0.0
    %175 = vmatprep.subr.mxu0 0.0
    %176 = vmatpush1.msra.mxu0 0.0
    %177 = vmatprep.subr.mxu0 0.0
    %178 = vmatpush1.msra.mxu0 0.0
    %179 = vmatprep.subr.mxu0 0.0
    %180 = vmatpush1.msra.mxu0 0.0
    %181 = vmatprep.subr.mxu0 0.0
    %182 = vmatpush1.msra.mxu0 0.0
    %183 = vmatprep.subr.mxu0 0.0
    %184 = vmatpush1.msra.mxu0 0.0
    %185 = vmatprep.subr.mxu0 0.0
    %186 = vmatpush1.msra.mxu0 0.0
    %187 = vmatprep.subr.mxu0 0.0
    %188 = vmatpush1.msra.mxu0 0.0
    %189 = vmatprep.subr.mxu0 0.0
    %190 = vmatpush1.msra.mxu0 0.0
    %191 = vmatprep.subr.mxu0 0.0
    %192 = vmatpush1.msra.mxu0 0.0
    %193 = vmatprep.subr.mxu0 0.0
    %194 = vmatpush1.msra.mxu0 0.0
    %195 = vmatprep.subr.mxu0 0.0
    %196 = vmatpush1.msra.mxu0 0.0
    %197 = vmatprep.subr.mxu0 0.0
    %198 = vmatpush1.msra.mxu0 0.0
    %199 = vmatprep.subr.mxu0 0.0
    %200 = vmatpush1.msra.mxu0 0.0
    %201 = vmatprep.subr.mxu0 0.0
    %202 = vmatpush1.msra.mxu0 0.0
    %203 = vmatprep.subr.mxu0 0.0
    %204 = vmatpush1.msra.mxu0 0.0
    %205 = vmatprep.subr.mxu0 0.0
    %206 = vmatpush1.msra.mxu0 0.0
    %207 = vmatprep.subr.mxu0 0.0
    %208 = vmatpush1.msra.mxu0 0.0
    %209 = vmatprep.subr.mxu0 0.0
    %210 = vmatpush1.msra.mxu0 0.0
    %211 = vmatprep.subr.mxu0 0.0
    %212 = vmatpush1.msra.mxu0 0.0
    %213 = vmatprep.subr.mxu0 0.0
    %214 = vmatpush1.msra.mxu0 0.0
    %215 = vmatprep.subr.mxu0 0.0
    %216 = vmatpush1.msra.mxu0 0.0
    %217 = vmatprep.subr.mxu0 0.0
    %218 = vmatpush1.msra.mxu0 0.0
    %219 = vmatprep.subr.mxu0 0.0
    %220 = vmatpush1.msra.mxu0 0.0
    %221 = vmatprep.subr.mxu0 0.0
    %222 = vmatpush1.msra.mxu0 0.0
    %223 = vmatprep.subr.mxu0 0.0
    %224 = vmatpush1.msra.mxu0 0.0
    %225 = vmatprep.subr.mxu0 0.0
    %226 = vmatpush1.msra.mxu0 0.0
    %227 = vmatprep.mubr.f32.mxu0 0.0
    %228 = vmatmul.mubr.f32.gmra.mrb[0].mxu0 %v152
    %v229 = vpop.f32.mrb[0].mxu0
    %v230 = vadd.f32 0.0, %v229
    %v231 = vpop.f32.mrb[0].mxu0
    %232 = vmatprep.mubr.f32.mxu0 0.0
    %233 = vmatmul.mubr.f32.gmra.mrb[0].mxu0 %v155
    %v234 = vpop.f32.mrb[0].mxu0
    %v235 = vadd.f32 0.0, %v234
    %v236 = vpop.f32.mrb[0].mxu0
    %237 = vmatprep.mubr.f32.mxu0 0.0
    %238 = vmatmul.mubr.f32.gmra.mrb[0].mxu0 %v158
    %v239 = vpop.f32.mrb[0].mxu0
    %v240 = vadd.f32 0.0, %v239
    %v241 = vpop.f32.mrb[0].mxu0
    %242 = vmatprep.mubr.f32.mxu0 0.0
    %243 = vmatmul.mubr.f32.gmra.mrb[0].mxu0 %v161
    %v244 = vpop.f32.mrb[0].mxu0
    %v245 = vadd.f32 0.0, %v244
    %v246 = vpop.f32.mrb[0].mxu0
    %247 = vdwg.mxu0
    %v248 = vadd.f32 %v114, %v230
    %v249 = vadd.f32 %v115, %v235
    %v250 = vadd.f32 %v116, %v240
    %v251 = vadd.f32 %v117, %v245
    %vm252 = vcmask 261120
    %253 = vst.msk [vmem:[#allocation2] sm:$0xff] %vm252, %v248
    %254 = vst.msk [vmem:[#allocation2 + $0x8] sm:$0xff] %vm252, %v249
    %255 = vst.msk [vmem:[#allocation2 + $0x10] sm:$0xff] %vm252, %v250
    %256 = vst.msk [vmem:[#allocation2 + $0x18] sm:$0xff] %vm252, %v251
    %v257 = vld [vmem:[#allocation3] sm:$0xff]
    %v258 = vld [vmem:[#allocation3 + $0x8] sm:$0xff]
    %v259 = vld [vmem:[#allocation3 + $0x10] sm:$0xff]
    %v260 = vld [vmem:[#allocation3 + $0x18] sm:$0xff]
    %261 = vxpose.xlu0.b32.start [1/16] %v112, 128
    %262 = vxpose.xlu0.b32.cont [2/16] 0.0, 128
    %263 = vxpose.xlu0.b32.cont [3/16] 0.0, 128
    %264 = vxpose.xlu0.b32.cont [4/16] 0.0, 128
    %265 = vxpose.xlu0.b32.cont [5/16] 0.0, 128
    %266 = vxpose.xlu0.b32.cont [6/16] 0.0, 128
    %267 = vxpose.xlu0.b32.cont [7/16] 0.0, 128
    %268 = vxpose.xlu0.b32.cont [8/16] 0.0, 128
    %269 = vxpose.xlu0.b32.cont [9/16] 0.0, 128
    %270 = vxpose.xlu0.b32.cont [10/16] 0.0, 128
    %271 = vxpose.xlu0.b32.cont [11/16] 0.0, 128
    %272 = vxpose.xlu0.b32.cont [12/16] 0.0, 128
    %273 = vxpose.xlu0.b32.cont [13/16] 0.0, 128
    %274 = vxpose.xlu0.b32.cont [14/16] 0.0, 128
    %275 = vxpose.xlu0.b32.cont [15/16] 0.0, 128
    %276 = vxpose.xlu0.b32.end [16/16] 0.0, 128
    %v277 = vpop.trf.xlu0
    %v278 = vpop.trf.xlu0
    %v279 = vpop.trf.xlu0
    %v280 = vpop.trf.xlu0
    %v281 = vpop.trf.xlu0
    %v282 = vpop.trf.xlu0
    %v283 = vpop.trf.xlu0
    %v284 = vpop.trf.xlu0
    %v285 = vpop.trf.xlu0
    %v286 = vpop.trf.xlu0
    %v287 = vpop.trf.xlu0
    %v288 = vpop.trf.xlu0
    %v289 = vpop.trf.xlu0
    %v290 = vpop.trf.xlu0
    %v291 = vpop.trf.xlu0
    %v292 = vpop.trf.xlu0
    %v294 = vsel %vm150, %v277, 0
    %v297 = vsel %vm150, %v278, 0
    %v300 = vsel %vm150, %v279, 0
    %v303 = vsel %vm150, %v280, 0
    %305 = vmatprep.subr.mxu0 0.0
    %306 = vmatpush1.msra.mxu0 %v113
    %307 = vmatprep.subr.mxu0 0.0
    %308 = vmatpush1.msra.mxu0 0.0
    %309 = vmatprep.subr.mxu0 0.0
    %310 = vmatpush1.msra.mxu0 0.0
    %311 = vmatprep.subr.mxu0 0.0
    %312 = vmatpush1.msra.mxu0 0.0
    %313 = vmatprep.subr.mxu0 0.0
    %314 = vmatpush1.msra.mxu0 0.0
    %315 = vmatprep.subr.mxu0 0.0
    %316 = vmatpush1.msra.mxu0 0.0
    %317 = vmatprep.subr.mxu0 0.0
    %318 = vmatpush1.msra.mxu0 0.0
    %319 = vmatprep.subr.mxu0 0.0
    %320 = vmatpush1.msra.mxu0 0.0
    %321 = vmatprep.subr.mxu0 0.0
    %322 = vmatpush1.msra.mxu0 0.0
    %323 = vmatprep.subr.mxu0 0.0
    %324 = vmatpush1.msra.mxu0 0.0
    %325 = vmatprep.subr.mxu0 0.0
    %326 = vmatpush1.msra.mxu0 0.0
    %327 = vmatprep.subr.mxu0 0.0
    %328 = vmatpush1.msra.mxu0 0.0
    %329 = vmatprep.subr.mxu0 0.0
    %330 = vmatpush1.msra.mxu0 0.0
    %331 = vmatprep.subr.mxu0 0.0
    %332 = vmatpush1.msra.mxu0 0.0
    %333 = vmatprep.subr.mxu0 0.0
    %334 = vmatpush1.msra.mxu0 0.0
    %335 = vmatprep.subr.mxu0 0.0
    %336 = vmatpush1.msra.mxu0 0.0
    %337 = vmatprep.subr.mxu0 0.0
    %338 = vmatpush1.msra.mxu0 0.0
    %339 = vmatprep.subr.mxu0 0.0
    %340 = vmatpush1.msra.mxu0 0.0
    %341 = vmatprep.subr.mxu0 0.0
    %342 = vmatpush1.msra.mxu0 0.0
    %343 = vmatprep.subr.mxu0 0.0
    %344 = vmatpush1.msra.mxu0 0.0
    %345 = vmatprep.subr.mxu0 0.0
    %346 = vmatpush1.msra.mxu0 0.0
    %347 = vmatprep.subr.mxu0 0.0
    %348 = vmatpush1.msra.mxu0 0.0
    %349 = vmatprep.subr.mxu0 0.0
    %350 = vmatpush1.msra.mxu0 0.0
    %351 = vmatprep.subr.mxu0 0.0
    %352 = vmatpush1.msra.mxu0 0.0
    %353 = vmatprep.subr.mxu0 0.0
    %354 = vmatpush1.msra.mxu0 0.0
    %355 = vmatprep.subr.mxu0 0.0
    %356 = vmatpush1.msra.mxu0 0.0
    %357 = vmatprep.subr.mxu0 0.0
    %358 = vmatpush1.msra.mxu0 0.0
    %359 = vmatprep.subr.mxu0 0.0
    %360 = vmatpush1.msra.mxu0 0.0
    %361 = vmatprep.subr.mxu0 0.0
    %362 = vmatpush1.msra.mxu0 0.0
    %363 = vmatprep.subr.mxu0 0.0
    %364 = vmatpush1.msra.mxu0 0.0
    %365 = vmatprep.subr.mxu0 0.0
    %366 = vmatpush1.msra.mxu0 0.0
    %367 = vmatprep.subr.mxu0 0.0
    %368 = vmatpush1.msra.mxu0 0.0
    %369 = vmatprep.mubr.f32.mxu0 0.0
    %370 = vmatmul.mubr.f32.gmra.mrb[0].mxu0 %v294
    %v371 = vpop.f32.mrb[0].mxu0
    %v372 = vadd.f32 0.0, %v371
    %v373 = vpop.f32.mrb[0].mxu0
    %374 = vmatprep.mubr.f32.mxu0 0.0
    %375 = vmatmul.mubr.f32.gmra.mrb[0].mxu0 %v297
    %v376 = vpop.f32.mrb[0].mxu0
    %v377 = vadd.f32 0.0, %v376
    %v378 = vpop.f32.mrb[0].mxu0
    %379 = vmatprep.mubr.f32.mxu0 0.0
    %380 = vmatmul.mubr.f32.gmra.mrb[0].mxu0 %v300
    %v381 = vpop.f32.mrb[0].mxu0
    %v382 = vadd.f32 0.0, %v381
    %v383 = vpop.f32.mrb[0].mxu0
    %384 = vmatprep.mubr.f32.mxu0 0.0
    %385 = vmatmul.mubr.f32.gmra.mrb[0].mxu0 %v303
    %v386 = vpop.f32.mrb[0].mxu0
    %v387 = vadd.f32 0.0, %v386
    %v388 = vpop.f32.mrb[0].mxu0
    %389 = vdwg.mxu0
    %v390 = vadd.f32 %v257, %v372
    %v391 = vadd.f32 %v258, %v377
    %v392 = vadd.f32 %v259, %v382
    %v393 = vadd.f32 %v260, %v387
    %394 = vst.msk [vmem:[#allocation3] sm:$0xff] %vm252, %v390
    %395 = vst.msk [vmem:[#allocation3 + $0x8] sm:$0xff] %vm252, %v391
    %396 = vst.msk [vmem:[#allocation3 + $0x10] sm:$0xff] %vm252, %v392
    %397 = vst.msk [vmem:[#allocation3 + $0x18] sm:$0xff] %vm252, %v393
    %v398 = vld [vmem:[#allocation4] sm:$0x1]
    %v399 = vsel %vm252, %v110, 0.0
    %v400 = vrot.slane %v399, 4
    %v401 = vadd.f32 %v399, %v400
    %v402 = vrot.slane %v401, 2
    %v403 = vadd.f32 %v401, %v402
    %v404 = vrot.slane %v403, 1
    %v405 = vadd.f32 %v403, %v404
    %v406 = vadd.f32 %v398, %v405
    %vm407 = vcmask 253952
    %408 = vst.msk [vmem:[#allocation4] sm:$0x1] %vm407, %v406
    %v409 = vld [vmem:[#allocation5] sm:$0x1]
    %v410 = vsel %vm252, %v111, 0.0
    %v411 = vrot.slane %v410, 4
    %v412 = vadd.f32 %v410, %v411
    %v413 = vrot.slane %v412, 2
    %v414 = vadd.f32 %v412, %v413
    %v415 = vrot.slane %v414, 1
    %v416 = vadd.f32 %v414, %v415
    %v417 = vadd.f32 %v409, %v416
    %418 = vst.msk [vmem:[#allocation5] sm:$0x1] %vm407, %v417
    %v419 = vld [vmem:[#allocation6] sm:$0x1]
    %v420 = vsel %vm252, %v112, 0.0
    %v421 = vrot.slane %v420, 4
    %v422 = vadd.f32 %v420, %v421
    %v423 = vrot.slane %v422, 2
    %v424 = vadd.f32 %v422, %v423
    %v425 = vrot.slane %v424, 1
    %v426 = vadd.f32 %v424, %v425
    %v427 = vadd.f32 %v419, %v426
    %428 = vst.msk [vmem:[#allocation6] sm:$0x1] %vm407, %v427
    %v429 = vld [vmem:[#allocation7] sm:$0x1]
    %v430 = vsel %vm252, %v113, 0.0
    %v431 = vrot.slane %v430, 4
    %v432 = vadd.f32 %v430, %v431
    %v433 = vrot.slane %v432, 2
    %v434 = vadd.f32 %v432, %v433
    %v435 = vrot.slane %v434, 1
    %v436 = vadd.f32 %v434, %v435
    %v437 = vadd.f32 %v429, %v436
    %438 = vst.msk [vmem:[#allocation7] sm:$0x1] %vm407, %v437
    // Predicated region
    $region30: #{tpu_custom_call.1} parent=1 // pred_check
      %p439 = pneg %p90
    $region31: #{tpu_custom_call.1} parent=1 // pred_check_branch
      %441 = sbr.rel (%p439) target = $region33
    $region32: #{tpu_custom_call.1} parent=1 // pred_region
      %v442 = vsub.f32 %v110, %v112
      %v443 = vld [vmem:[#allocation8] sm:$0x1]
      %v444 = vmul.f32 %v442, %v442
      %v445 = vsel %vm252, %v444, 0.0
      %v446 = vrot.slane %v445, 4
      %v447 = vadd.f32 %v445, %v446
      %v448 = vrot.slane %v447, 2
      %v449 = vadd.f32 %v447, %v448
      %v450 = vrot.slane %v449, 1
      %v451 = vadd.f32 %v449, %v450
      %v452 = vadd.f32 %v443, %v451
      %453 = vst.msk [vmem:[#allocation8] sm:$0x1] %vm407, %v452
    $region33: #{tpu_custom_call.1} parent=1 // pred_fallthru
      _
    // Predicated region
    $region34: #{tpu_custom_call.1} parent=1 // pred_check
      %p454 = pneg %p91
    $region35: #{tpu_custom_call.1} parent=1 // pred_check_branch
      %456 = sbr.rel (%p454) target = $region37
    $region36: #{tpu_custom_call.1} parent=1 // pred_region
      %v457 = vld [vmem:[#allocation4] sm:$0x1]
      %v458 = vld [vmem:[#allocation5] sm:$0x1]
      %459 = vxpose.xlu0.b32.start [1/16] %v457, 128
      %460 = vxpose.xlu0.b32.cont [2/16] 0.0, 128
      %461 = vxpose.xlu0.b32.cont [3/16] 0.0, 128
      %462 = vxpose.xlu0.b32.cont [4/16] 0.0, 128
      %463 = vxpose.xlu0.b32.cont [5/16] 0.0, 128
      %464 = vxpose.xlu0.b32.cont [6/16] 0.0, 128
      %465 = vxpose.xlu0.b32.cont [7/16] 0.0, 128
      %466 = vxpose.xlu0.b32.cont [8/16] 0.0, 128
      %467 = vxpose.xlu0.b32.cont [9/16] 0.0, 128
      %468 = vxpose.xlu0.b32.cont [10/16] 0.0, 128
      %469 = vxpose.xlu0.b32.cont [11/16] 0.0, 128
      %470 = vxpose.xlu0.b32.cont [12/16] 0.0, 128
      %471 = vxpose.xlu0.b32.cont [13/16] 0.0, 128
      %472 = vxpose.xlu0.b32.cont [14/16] 0.0, 128
      %473 = vxpose.xlu0.b32.cont [15/16] 0.0, 128
      %474 = vxpose.xlu0.b32.end [16/16] 0.0, 128
      %v475 = vpop.trf.xlu0
      %v476 = vpop.trf.xlu0
      %v477 = vpop.trf.xlu0
      %v478 = vpop.trf.xlu0
      %v479 = vpop.trf.xlu0
      %v480 = vpop.trf.xlu0
      %v481 = vpop.trf.xlu0
      %v482 = vpop.trf.xlu0
      %v483 = vpop.trf.xlu0
      %v484 = vpop.trf.xlu0
      %v485 = vpop.trf.xlu0
      %v486 = vpop.trf.xlu0
      %v487 = vpop.trf.xlu0
      %v488 = vpop.trf.xlu0
      %v489 = vpop.trf.xlu0
      %v490 = vpop.trf.xlu0
      %vm491 = vcmask 7168
      %v493 = vsel %vm491, %v475, 0
      %v496 = vsel %vm491, %v476, 0
      %v499 = vsel %vm491, %v477, 0
      %v502 = vsel %vm491, %v478, 0
      %vm504 = vcmask 1040384
      %v506 = vsel %vm504, %v458, 0
      %508 = vmatprep.subr.mxu0 0.0
      %509 = vmatpush1.msra.mxu0 %v506
      %510 = vmatprep.subr.mxu0 0.0
      %511 = vmatpush1.msra.mxu0 0.0
      %512 = vmatprep.subr.mxu0 0.0
      %513 = vmatpush1.msra.mxu0 0.0
      %514 = vmatprep.subr.mxu0 0.0
      %515 = vmatpush1.msra.mxu0 0.0
      %516 = vmatprep.subr.mxu0 0.0
      %517 = vmatpush1.msra.mxu0 0.0
      %518 = vmatprep.subr.mxu0 0.0
      %519 = vmatpush1.msra.mxu0 0.0
      %520 = vmatprep.subr.mxu0 0.0
      %521 = vmatpush1.msra.mxu0 0.0
      %522 = vmatprep.subr.mxu0 0.0
      %523 = vmatpush1.msra.mxu0 0.0
      %524 = vmatprep.subr.mxu0 0.0
      %525 = vmatpush1.msra.mxu0 0.0
      %526 = vmatprep.subr.mxu0 0.0
      %527 = vmatpush1.msra.mxu0 0.0
      %528 = vmatprep.subr.mxu0 0.0
      %529 = vmatpush1.msra.mxu0 0.0
      %530 = vmatprep.subr.mxu0 0.0
      %531 = vmatpush1.msra.mxu0 0.0
      %532 = vmatprep.subr.mxu0 0.0
      %533 = vmatpush1.msra.mxu0 0.0
      %534 = vmatprep.subr.mxu0 0.0
      %535 = vmatpush1.msra.mxu0 0.0
      %536 = vmatprep.subr.mxu0 0.0
      %537 = vmatpush1.msra.mxu0 0.0
      %538 = vmatprep.subr.mxu0 0.0
      %539 = vmatpush1.msra.mxu0 0.0
      %540 = vmatprep.subr.mxu0 0.0
      %541 = vmatpush1.msra.mxu0 0.0
      %542 = vmatprep.subr.mxu0 0.0
      %543 = vmatpush1.msra.mxu0 0.0
      %544 = vmatprep.subr.mxu0 0.0
      %545 = vmatpush1.msra.mxu0 0.0
      %546 = vmatprep.subr.mxu0 0.0
      %547 = vmatpush1.msra.mxu0 0.0
      %548 = vmatprep.subr.mxu0 0.0
      %549 = vmatpush1.msra.mxu0 0.0
      %550 = vmatprep.subr.mxu0 0.0
      %551 = vmatpush1.msra.mxu0 0.0
      %552 = vmatprep.subr.mxu0 0.0
      %553 = vmatpush1.msra.mxu0 0.0
      %554 = vmatprep.subr.mxu0 0.0
      %555 = vmatpush1.msra.mxu0 0.0
      %556 = vmatprep.subr.mxu0 0.0
      %557 = vmatpush1.msra.mxu0 0.0
      %558 = vmatprep.subr.mxu0 0.0
      %559 = vmatpush1.msra.mxu0 0.0
      %560 = vmatprep.subr.mxu0 0.0
      %561 = vmatpush1.msra.mxu0 0.0
      %562 = vmatprep.subr.mxu0 0.0
      %563 = vmatpush1.msra.mxu0 0.0
      %564 = vmatprep.subr.mxu0 0.0
      %565 = vmatpush1.msra.mxu0 0.0
      %566 = vmatprep.subr.mxu0 0.0
      %567 = vmatpush1.msra.mxu0 0.0
      %568 = vmatprep.subr.mxu0 0.0
      %569 = vmatpush1.msra.mxu0 0.0
      %570 = vmatprep.subr.mxu0 0.0
      %571 = vmatpush1.msra.mxu0 0.0
      %572 = vmatprep.mubr.f32.mxu0 0.0
      %573 = vmatmul.mubr.f32.gmra.mrb[0].mxu0 %v493
      %v574 = vpop.f32.mrb[0].mxu0
      %v575 = vadd.f32 0.0, %v574
      %v576 = vpop.f32.mrb[0].mxu0
      %577 = vmatprep.mubr.f32.mxu0 0.0
      %578 = vmatmul.mubr.f32.gmra.mrb[0].mxu0 %v496
      %v579 = vpop.f32.mrb[0].mxu0
      %v580 = vadd.f32 0.0, %v579
      %v581 = vpop.f32.mrb[0].mxu0
      %582 = vmatprep.mubr.f32.mxu0 0.0
      %583 = vmatmul.mubr.f32.gmra.mrb[0].mxu0 %v499
      %v584 = vpop.f32.mrb[0].mxu0
      %v585 = vadd.f32 0.0, %v584
      %v586 = vpop.f32.mrb[0].mxu0
      %587 = vmatprep.mubr.f32.mxu0 0.0
      %588 = vmatmul.mubr.f32.gmra.mrb[0].mxu0 %v502
      %v589 = vpop.f32.mrb[0].mxu0
      %v590 = vadd.f32 0.0, %v589
      %v591 = vpop.f32.mrb[0].mxu0
      %592 = vdwg.mxu0
      %v593 = vmul.f32 %v575, 0.125
      %v594 = vmul.f32 %v580, 0.125
      %v595 = vmul.f32 %v585, 0.125
      %v596 = vmul.f32 %v590, 0.125
      %v597 = vld [vmem:[#allocation6] sm:$0x1]
      %v598 = vld [vmem:[#allocation7] sm:$0x1]
      %599 = vxpose.xlu0.b32.start [1/16] %v597, 128
      %600 = vxpose.xlu0.b32.cont [2/16] 0.0, 128
      %601 = vxpose.xlu0.b32.cont [3/16] 0.0, 128
      %602 = vxpose.xlu0.b32.cont [4/16] 0.0, 128
      %603 = vxpose.xlu0.b32.cont [5/16] 0.0, 128
      %604 = vxpose.xlu0.b32.cont [6/16] 0.0, 128
      %605 = vxpose.xlu0.b32.cont [7/16] 0.0, 128
      %606 = vxpose.xlu0.b32.cont [8/16] 0.0, 128
      %607 = vxpose.xlu0.b32.cont [9/16] 0.0, 128
      %608 = vxpose.xlu0.b32.cont [10/16] 0.0, 128
      %609 = vxpose.xlu0.b32.cont [11/16] 0.0, 128
      %610 = vxpose.xlu0.b32.cont [12/16] 0.0, 128
      %611 = vxpose.xlu0.b32.cont [13/16] 0.0, 128
      %612 = vxpose.xlu0.b32.cont [14/16] 0.0, 128
      %613 = vxpose.xlu0.b32.cont [15/16] 0.0, 128
      %614 = vxpose.xlu0.b32.end [16/16] 0.0, 128
      %v615 = vpop.trf.xlu0
      %v616 = vpop.trf.xlu0
      %v617 = vpop.trf.xlu0
      %v618 = vpop.trf.xlu0
      %v619 = vpop.trf.xlu0
      %v620 = vpop.trf.xlu0
      %v621 = vpop.trf.xlu0
      %v622 = vpop.trf.xlu0
      %v623 = vpop.trf.xlu0
      %v624 = vpop.trf.xlu0
      %v625 = vpop.trf.xlu0
      %v626 = vpop.trf.xlu0
      %v627 = vpop.trf.xlu0
      %v628 = vpop.trf.xlu0
      %v629 = vpop.trf.xlu0
      %v630 = vpop.trf.xlu0
      %v632 = vsel %vm491, %v615, 0
      %v635 = vsel %vm491, %v616, 0
      %v638 = vsel %vm491, %v617, 0
      %v641 = vsel %vm491, %v618, 0
      %v644 = vsel %vm504, %v598, 0
      %646 = vmatprep.subr.mxu0 0.0
      %647 = vmatpush1.msra.mxu0 %v644
      %648 = vmatprep.subr.mxu0 0.0
      %649 = vmatpush1.msra.mxu0 0.0
      %650 = vmatprep.subr.mxu0 0.0
      %651 = vmatpush1.msra.mxu0 0.0
      %652 = vmatprep.subr.mxu0 0.0
      %653 = vmatpush1.msra.mxu0 0.0
      %654 = vmatprep.subr.mxu0 0.0
      %655 = vmatpush1.msra.mxu0 0.0
      %656 = vmatprep.subr.mxu0 0.0
      %657 = vmatpush1.msra.mxu0 0.0
      %658 = vmatprep.subr.mxu0 0.0
      %659 = vmatpush1.msra.mxu0 0.0
      %660 = vmatprep.subr.mxu0 0.0
      %661 = vmatpush1.msra.mxu0 0.0
      %662 = vmatprep.subr.mxu0 0.0
      %663 = vmatpush1.msra.mxu0 0.0
      %664 = vmatprep.subr.mxu0 0.0
      %665 = vmatpush1.msra.mxu0 0.0
      %666 = vmatprep.subr.mxu0 0.0
      %667 = vmatpush1.msra.mxu0 0.0
      %668 = vmatprep.subr.mxu0 0.0
      %669 = vmatpush1.msra.mxu0 0.0
      %670 = vmatprep.subr.mxu0 0.0
      %671 = vmatpush1.msra.mxu0 0.0
      %672 = vmatprep.subr.mxu0 0.0
      %673 = vmatpush1.msra.mxu0 0.0
      %674 = vmatprep.subr.mxu0 0.0
      %675 = vmatpush1.msra.mxu0 0.0
      %676 = vmatprep.subr.mxu0 0.0
      %677 = vmatpush1.msra.mxu0 0.0
      %678 = vmatprep.subr.mxu0 0.0
      %679 = vmatpush1.msra.mxu0 0.0
      %680 = vmatprep.subr.mxu0 0.0
      %681 = vmatpush1.msra.mxu0 0.0
      %682 = vmatprep.subr.mxu0 0.0
      %683 = vmatpush1.msra.mxu0 0.0
      %684 = vmatprep.subr.mxu0 0.0
      %685 = vmatpush1.msra.mxu0 0.0
      %686 = vmatprep.subr.mxu0 0.0
      %687 = vmatpush1.msra.mxu0 0.0
      %688 = vmatprep.subr.mxu0 0.0
      %689 = vmatpush1.msra.mxu0 0.0
      %690 = vmatprep.subr.mxu0 0.0
      %691 = vmatpush1.msra.mxu0 0.0
      %692 = vmatprep.subr.mxu0 0.0
      %693 = vmatpush1.msra.mxu0 0.0
      %694 = vmatprep.subr.mxu0 0.0
      %695 = vmatpush1.msra.mxu0 0.0
      %696 = vmatprep.subr.mxu0 0.0
      %697 = vmatpush1.msra.mxu0 0.0
      %698 = vmatprep.subr.mxu0 0.0
      %699 = vmatpush1.msra.mxu0 0.0
      %700 = vmatprep.subr.mxu0 0.0
      %701 = vmatpush1.msra.mxu0 0.0
      %702 = vmatprep.subr.mxu0 0.0
      %703 = vmatpush1.msra.mxu0 0.0
      %704 = vmatprep.subr.mxu0 0.0
      %705 = vmatpush1.msra.mxu0 0.0
      %706 = vmatprep.subr.mxu0 0.0
      %707 = vmatpush1.msra.mxu0 0.0
      %708 = vmatprep.subr.mxu0 0.0
      %709 = vmatpush1.msra.mxu0 0.0
      %710 = vmatprep.mubr.f32.mxu0 0.0
      %711 = vmatmul.mubr.f32.gmra.mrb[0].mxu0 %v632
      %v712 = vpop.f32.mrb[0].mxu0
      %v713 = vadd.f32 0.0, %v712
      %v714 = vpop.f32.mrb[0].mxu0
      %715 = vmatprep.mubr.f32.mxu0 0.0
      %716 = vmatmul.mubr.f32.gmra.mrb[0].mxu0 %v635
      %v717 = vpop.f32.mrb[0].mxu0
      %v718 = vadd.f32 0.0, %v717
      %v719 = vpop.f32.mrb[0].mxu0
      %720 = vmatprep.mubr.f32.mxu0 0.0
      %721 = vmatmul.mubr.f32.gmra.mrb[0].mxu0 %v638
      %v722 = vpop.f32.mrb[0].mxu0
      %v723 = vadd.f32 0.0, %v722
      %v724 = vpop.f32.mrb[0].mxu0
      %725 = vmatprep.mubr.f32.mxu0 0.0
      %726 = vmatmul.mubr.f32.gmra.mrb[0].mxu0 %v641
      %v727 = vpop.f32.mrb[0].mxu0
      %v728 = vadd.f32 0.0, %v727
      %v729 = vpop.f32.mrb[0].mxu0
      %730 = vdwg.mxu0
      %v731 = vmul.f32 %v713, 0.125
      %v732 = vmul.f32 %v718, 0.125
      %v733 = vmul.f32 %v723, 0.125
      %v734 = vmul.f32 %v728, 0.125
      %v735 = vld [vmem:[#allocation2] sm:$0xff]
      %v736 = vld [vmem:[#allocation2 + $0x8] sm:$0xff]
      %v737 = vld [vmem:[#allocation2 + $0x10] sm:$0xff]
      %v738 = vld [vmem:[#allocation2 + $0x18] sm:$0xff]
      %v739 = vsub.f32 %v735, %v593
      %v740 = vsub.f32 %v736, %v594
      %v741 = vsub.f32 %v737, %v595
      %v742 = vsub.f32 %v738, %v596
      %v743 = vld [vmem:[#allocation3] sm:$0xff]
      %v744 = vld [vmem:[#allocation3 + $0x8] sm:$0xff]
      %v745 = vld [vmem:[#allocation3 + $0x10] sm:$0xff]
      %v746 = vld [vmem:[#allocation3 + $0x18] sm:$0xff]
      %v747 = vsub.f32 %v743, %v731
      %v748 = vsub.f32 %v744, %v732
      %v749 = vsub.f32 %v745, %v733
      %v750 = vsub.f32 %v746, %v734
      %s751 = scalar_select %p90, 1.0, 2.0
      %s752 = scalar_select %p90, 1.0, 0.0
      %v753 = vmul.f32 %v739, %v739
      %v754 = vmul.f32 %v740, %v740
      %v755 = vmul.f32 %v741, %v741
      %v756 = vmul.f32 %v742, %v742
      %v757 = vsel %vm252, %v753, 0.0
      %v758 = vsel %vm252, %v754, 0.0
      %v759 = vadd.f32 %v757, %v758
      %v760 = vsel %vm252, %v755, 0.0
      %v761 = vadd.f32 %v759, %v760
      %v762 = vsel %vm252, %v756, 0.0
      %v763 = vadd.f32 %v761, %v762
      %764 = vadd.xlane.f32.xlu0 %v763
      %v765 = vpop.xlane.xlu0 %764
      %v766 = vrot.slane %v765, 4
      %v767 = vadd.f32 %v765, %v766
      %v768 = vrot.slane %v767, 2
      %v769 = vadd.f32 %v767, %v768
      %v770 = vrot.slane %v769, 1
      %v771 = vadd.f32 %v769, %v770
      %s772 = vtos %v771
      %s773 = smul.f32 %s772, %s751
      %v774 = vmul.f32 %v747, %v747
      %v775 = vmul.f32 %v748, %v748
      %v776 = vmul.f32 %v749, %v749
      %v777 = vmul.f32 %v750, %v750
      %v778 = vsel %vm252, %v774, 0.0
      %v779 = vsel %vm252, %v775, 0.0
      %v780 = vadd.f32 %v778, %v779
      %v781 = vsel %vm252, %v776, 0.0
      %v782 = vadd.f32 %v780, %v781
      %v783 = vsel %vm252, %v777, 0.0
      %v784 = vadd.f32 %v782, %v783
      %785 = vadd.xlane.f32.xlu0 %v784
      %v786 = vpop.xlane.xlu0 %785
      %v787 = vrot.slane %v786, 4
      %v788 = vadd.f32 %v786, %v787
      %v789 = vrot.slane %v788, 2
      %v790 = vadd.f32 %v788, %v789
      %v791 = vrot.slane %v790, 1
      %v792 = vadd.f32 %v790, %v791
      %s793 = vtos %v792
      %s794 = smul.f32 %s793, %s751
      %v795 = vlaneseq
      %v796 = vshrl.u32 %v795, 7
      %v797 = vadd.s32 %v796, 8
      %v798 = vadd.s32 %v796, 16
      %v799 = vadd.s32 %v796, 24
      %v800 = vlaneseq
      %v801 = vand.u32 %v800, 127
      %vm802 = vcmp.eq.s32.totalorder %v796, %v801
      %vm803 = vcmp.eq.s32.totalorder %v797, %v801
      %vm804 = vcmp.eq.s32.totalorder %v798, %v801
      %vm805 = vcmp.eq.s32.totalorder %v799, %v801
      %v806 = vsel %vm802, 1, 0
      %v807 = vsel %vm803, 1, 0
      %v808 = vsel %vm804, 1, 0
      %v809 = vsel %vm805, 1, 0
      %v810 = vcvt.s32.f32 %v806
      %v811 = vcvt.s32.f32 %v807
      %v812 = vcvt.s32.f32 %v808
      %v813 = vcvt.s32.f32 %v809
      %v814 = vmul.f32 %v739, %v810
      %v815 = vmul.f32 %v740, %v811
      %v816 = vmul.f32 %v741, %v812
      %v817 = vmul.f32 %v742, %v813
      %v818 = vsel %vm252, %v814, 0.0
      %v819 = vsel %vm252, %v815, 0.0
      %v820 = vadd.f32 %v818, %v819
      %v821 = vsel %vm252, %v816, 0.0
      %v822 = vadd.f32 %v820, %v821
      %v823 = vsel %vm252, %v817, 0.0
      %v824 = vadd.f32 %v822, %v823
      %v825 = vrot.slane %v824, 4
      %v826 = vadd.f32 %v824, %v825
      %v827 = vrot.slane %v826, 2
      %v828 = vadd.f32 %v826, %v827
      %v829 = vrot.slane %v828, 1
      %v830 = vadd.f32 %v828, %v829
      %v831 = vmul.f32 %v747, %v810
      %v832 = vmul.f32 %v748, %v811
      %v833 = vmul.f32 %v749, %v812
      %v834 = vmul.f32 %v750, %v813
      %v835 = vsel %vm252, %v831, 0.0
      %v836 = vsel %vm252, %v832, 0.0
      %v837 = vadd.f32 %v835, %v836
      %v838 = vsel %vm252, %v833, 0.0
      %v839 = vadd.f32 %v837, %v838
      %v840 = vsel %vm252, %v834, 0.0
      %v841 = vadd.f32 %v839, %v840
      %v842 = vrot.slane %v841, 4
      %v843 = vadd.f32 %v841, %v842
      %v844 = vrot.slane %v843, 2
      %v845 = vadd.f32 %v843, %v844
      %v846 = vrot.slane %v845, 1
      %v847 = vadd.f32 %v845, %v846
      %v848 = vmul.f32 %v830, %v830
      %v849 = vsel %vm407, %v848, 0.0
      %850 = vadd.xlane.f32.xlu0 %v849
      %v851 = vpop.xlane.xlu0 %850
      %v852 = vrot.slane %v851, 4
      %v853 = vadd.f32 %v851, %v852
      %v854 = vrot.slane %v853, 2
      %v855 = vadd.f32 %v853, %v854
      %v856 = vrot.slane %v855, 1
      %v857 = vadd.f32 %v855, %v856
      %s858 = vtos %v857
      %s859 = smul.f32 %s858, %s752
      %v860 = vmul.f32 %v847, %v847
      %v861 = vsel %vm407, %v860, 0.0
      %862 = vadd.xlane.f32.xlu0 %v861
      %v863 = vpop.xlane.xlu0 %862
      %v864 = vrot.slane %v863, 4
      %v865 = vadd.f32 %v863, %v864
      %v866 = vrot.slane %v865, 2
      %v867 = vadd.f32 %v865, %v866
      %v868 = vrot.slane %v867, 1
      %v869 = vadd.f32 %v867, %v868
      %s870 = vtos %v869
      %s871 = smul.f32 %s870, %s752
      %v872 = vmax.f32 %v830, 0.0
      %v873 = vmul.f32 %v872, 0.14285715
      %v874 = vmax.f32 %v847, 0.0
      %v875 = vmul.f32 %v874, 0.14285715
      %v876 = vadd.f32 %v873, 0.0001
      %v877 = vrsqrt.pop %v876
      %v878 = vmul.f32 %v876, %v877
      %vm879 = vcmp.eq.f32.partialorder %v876, inf
      %v880 = vsel %vm879, %v876, %v878
      %vm881 = vcmp.eq.f32.partialorder %v876, 0.0
      %v882 = vand.u32 %v876, 2147483648
      %v883 = vsel %vm881, %v882, %v880
      %v884 = vadd.f32 %v875, 0.0001
      %v885 = vrsqrt.pop %v884
      %v886 = vmul.f32 %v884, %v885
      %vm887 = vcmp.eq.f32.partialorder %v884, inf
      %v888 = vsel %vm887, %v884, %v886
      %vm889 = vcmp.eq.f32.partialorder %v884, 0.0
      %v890 = vand.u32 %v884, 2147483648
      %v891 = vsel %vm889, %v890, %v888
      %v892 = vsub.f32 1.0, %v883
      %v893 = vmax.f32 %v892, 0.0
      %v894 = vsel %vm407, %v893, 0.0
      %895 = vadd.xlane.f32.xlu0 %v894
      %v896 = vpop.xlane.xlu0 %895
      %v897 = vrot.slane %v896, 4
      %v898 = vadd.f32 %v896, %v897
      %v899 = vrot.slane %v898, 2
      %v900 = vadd.f32 %v898, %v899
      %v901 = vrot.slane %v900, 1
      %v902 = vadd.f32 %v900, %v901
      %s903 = vtos %v902
      %s904 = smul.f32 %s903, %s752
      %v905 = vsub.f32 1.0, %v891
      %v906 = vmax.f32 %v905, 0.0
      %v907 = vsel %vm407, %v906, 0.0
      %908 = vadd.xlane.f32.xlu0 %v907
      %v909 = vpop.xlane.xlu0 %908
      %v910 = vrot.slane %v909, 4
      %v911 = vadd.f32 %v909, %v910
      %v912 = vrot.slane %v911, 2
      %v913 = vadd.f32 %v911, %v912
      %v914 = vrot.slane %v913, 1
      %v915 = vadd.f32 %v913, %v914
      %s916 = vtos %v915
      %s917 = smul.f32 %s916, %s752
      %v918 = vld [vmem:[#allocation8] sm:$0x1]
      %v919 = vsel %vm407, %v918, 0.0
      %920 = vadd.xlane.f32.xlu0 %v919
      %v921 = vpop.xlane.xlu0 %920
      %v922 = vrot.slane %v921, 4
      %v923 = vadd.f32 %v921, %v922
      %v924 = vrot.slane %v923, 2
      %v925 = vadd.f32 %v923, %v924
      %v926 = vrot.slane %v925, 1
      %v927 = vadd.f32 %v925, %v926
      %s928 = vtos %v927
      %vm929 = vcmp.eq.s32.totalorder %v801, 0
      %v930 = vstv %s773
      %v931 = vsel %vm929, %v930, 0.0
      %vm932 = vcmp.eq.s32.totalorder %v801, 1
      %v933 = vstv %s794
      %v934 = vsel %vm932, %v933, 0.0
      %v935 = vadd.f32 %v931, %v934
      %vm936 = vcmp.eq.s32.totalorder %v801, 2
      %v937 = vstv %s859
      %v938 = vsel %vm936, %v937, 0.0
      %v939 = vadd.f32 %v935, %v938
      %vm940 = vcmp.eq.s32.totalorder %v801, 3
      %v941 = vstv %s871
      %v942 = vsel %vm940, %v941, 0.0
      %v943 = vadd.f32 %v939, %v942
      %vm944 = vcmp.eq.s32.totalorder %v801, 4
      %v945 = vstv %s904
      %v946 = vsel %vm944, %v945, 0.0
      %v947 = vadd.f32 %v943, %v946
      %vm948 = vcmp.eq.s32.totalorder %v801, 5
      %v949 = vstv %s917
      %v950 = vsel %vm948, %v949, 0.0
      %v951 = vadd.f32 %v947, %v950
      %vm952 = vcmp.eq.s32.totalorder %v801, 6
      %v953 = vstv %s928
      %v954 = vsel %vm952, %v953, 0.0
      %v955 = vadd.f32 %v951, %v954
      %vm956 = vcmask 57344
      %957 = vst.msk [vmem:[#allocation17] sm:$0x1] %vm956, %v955
    $region37: #{tpu_custom_call.1} parent=1 // pred_fallthru
      _
    // Predicated region
    $region38: #{tpu_custom_call.1} parent=1 // pred_check
      _
    $region39: #{tpu_custom_call.1} parent=1 // pred_check_branch
      %959 = sbr.rel (0) target = $region41
    $region40: #{tpu_custom_call.1} parent=1 // pred_region
      %s961 = ssub.s32 16, 16
      %962 = vsyncadd [#allocation14], %s961
      %s964 = sshll.u32 [#allocation17], 4
      %s965 = int_to_ptr.vmem [resolvable:$true] %s964
      %967 = dma.vmem_to_hbm [thread:$0]  %s965, 16, %s6, [#allocation14]
    $region41: #{tpu_custom_call.1} parent=1 // pred_fallthru
      _
    // Predicated region
    $region42: #{tpu_custom_call.1} parent=1 // pred_check
      _
    $region43: #{tpu_custom_call.1} parent=1 // pred_check_branch
      %969 = sbr.rel (0) target = $region45
    $region44: #{tpu_custom_call.1} parent=1 // pred_region
      %970 = dma.done [#allocation14], 16
    $region45: #{tpu_custom_call.1} parent=1 // pred_fallthru
      _
    %971 = vsyncpa [#allocation13], 1
    %972 = vsyncpa [#allocation16], 1
    %973 = vsyncpa [#allocation14], 1

</llo_original>
